<compile_context>
chip_gen: v5e
topology: v5e:2x2
jax: 0.10.0
libtpu: 0.0.40
codegen_flags: <defaults>
</compile_context>

<pallas_src>
import math

import jax
import jax.numpy as jnp
from jax.experimental import pallas as pl
from jax.experimental.pallas import tpu as pltpu


_LANE = 128
_VMEM_LIMIT = 32 * 1024 * 1024


def _round_up(v, m):
    return ((v + m - 1) // m) * m


def _pad2(a, rows, cols):
    r, c = a.shape
    return jnp.pad(a, ((0, rows - r), (0, cols - c)))


# ----------------------------- Pallas kernels ------------------------------ #

def edge_stage_kernel(ht_ref, xw_ref, de_inv_ref, alpha_e_ref, e_out_ref):
    """E[i] = PReLU(de_inv[i] * sum_k H^T[i, k] @ XW[k]).

    XW = x @ W1 + b1 is precomputed (hoisted).  The f32 output block stays
    resident across the reduction axis (grid axis 1) and is used directly as
    the accumulator; scale + PReLU happen in place at the last k step.
    """
    k = pl.program_id(1)

    @pl.when(k == 0)
    def _():
        e_out_ref[...] = jnp.zeros_like(e_out_ref)

    e_out_ref[...] += jnp.dot(ht_ref[...], xw_ref[...],
                              preferred_element_type=jnp.float32)

    @pl.when(k == pl.num_programs(1) - 1)
    def _():
        e = de_inv_ref[...] * e_out_ref[...]
        alpha = alpha_e_ref[0]
        e_out_ref[...] = jnp.where(e > 0, e, alpha * e)


def node_stage_kernel(h_ref, ew_ref, s_ref, dn_inv_ref, alpha_n_ref, n_out_ref):
    """N[i] = PReLU(dn_inv[i] * (S[i] + sum_k H[i, k] @ EW[k])).

    EW = E @ W2 + b2 (bf16) and the self-loop term S = PReLU(XW) @ W2 + b2
    are precomputed (hoisted); the kernel streams only H and EW and
    accumulates directly into the f32 output block.
    """
    k = pl.program_id(1)

    @pl.when(k == 0)
    def _():
        n_out_ref[...] = s_ref[...]

    n_out_ref[...] += jnp.dot(h_ref[...], ew_ref[...],
                              preferred_element_type=jnp.float32)

    @pl.when(k == pl.num_programs(1) - 1)
    def _():
        n = dn_inv_ref[...] * n_out_ref[...]
        alpha = alpha_n_ref[0]
        n_out_ref[...] = jnp.where(n > 0, n, alpha * n)


# ------------------------------ stage wrappers ------------------------------ #

def edge_stage(HT, xw, de_inv, alpha_e, *, tile_e=512, tile_kn=512):
    e_pad, n_pad = HT.shape
    d_edge = xw.shape[1]
    grid = (e_pad // tile_e, n_pad // tile_kn)

    flops = 2 * n_pad * e_pad * d_edge
    bytes_accessed = (e_pad * n_pad * 2                 # H^T (bf16), streamed once
                      + grid[0] * n_pad * d_edge * 2    # XW bf16, re-streamed per row tile
                      + e_pad * d_edge * 4              # E out (f32)
                      + e_pad * 4)                      # de_inv

    return pl.pallas_call(
        edge_stage_kernel,
        grid=grid,
        in_specs=[
            pl.BlockSpec((tile_e, tile_kn), lambda i, k: (i, k)),   # H^T (bf16)
            pl.BlockSpec((tile_kn, d_edge), lambda i, k: (k, 0)),   # XW  (bf16)
            pl.BlockSpec((tile_e, 1), lambda i, k: (i, 0)),         # de_inv
            pl.BlockSpec(memory_space=pltpu.MemorySpace.SMEM),      # alpha_e
        ],
        out_specs=pl.BlockSpec((tile_e, d_edge), lambda i, k: (i, 0)),
        out_shape=jax.ShapeDtypeStruct((e_pad, d_edge), jnp.float32),
        compiler_params=pltpu.CompilerParams(
            dimension_semantics=("parallel", "arbitrary"),
            vmem_limit_bytes=_VMEM_LIMIT),
        cost_estimate=pl.CostEstimate(flops=flops, transcendentals=0,
                                      bytes_accessed=bytes_accessed),
    )(HT, xw, de_inv, alpha_e)


def node_stage(H, ew, s, dn_inv, alpha_n, *, tile_n=512, tile_ke=512):
    n_pad, e_pad = H.shape
    d_node = ew.shape[1]
    grid = (n_pad // tile_n, e_pad // tile_ke)

    flops = 2 * n_pad * e_pad * d_node
    bytes_accessed = (n_pad * e_pad * 2                 # H (bf16), streamed once
                      + grid[0] * e_pad * d_node * 2    # EW bf16, re-streamed per row tile
                      + n_pad * d_node * 4 * 2          # S in + N out (f32)
                      + n_pad * 4)                      # dn_inv

    return pl.pallas_call(
        node_stage_kernel,
        grid=grid,
        in_specs=[
            pl.BlockSpec((tile_n, tile_ke), lambda i, k: (i, k)),   # H  (bf16)
            pl.BlockSpec((tile_ke, d_node), lambda i, k: (k, 0)),   # EW (bf16)
            pl.BlockSpec((tile_n, d_node), lambda i, k: (i, 0)),    # S  (f32)
            pl.BlockSpec((tile_n, 1), lambda i, k: (i, 0)),         # dn_inv
            pl.BlockSpec(memory_space=pltpu.MemorySpace.SMEM),      # alpha_n
        ],
        out_specs=pl.BlockSpec((tile_n, d_node), lambda i, k: (i, 0)),
        out_shape=jax.ShapeDtypeStruct((n_pad, d_node), jnp.float32),
        compiler_params=pltpu.CompilerParams(
            dimension_semantics=("parallel", "arbitrary"),
            vmem_limit_bytes=_VMEM_LIMIT),
        cost_estimate=pl.CostEstimate(flops=flops, transcendentals=0,
                                      bytes_accessed=bytes_accessed),
    )(H, ew, s, dn_inv, alpha_n)


# ------------------------------ model glue --------------------------------- #

def init_linear(key, in_dim, out_dim):
    kw, kb = jax.random.split(key)
    bound = 1.0 / jnp.sqrt(jnp.float32(in_dim))
    w = jax.random.uniform(kw, (in_dim, out_dim), jnp.float32, -bound, bound)
    b = jax.random.uniform(kb, (1, out_dim), jnp.float32, -bound, bound)
    return w, b


def init_hyfi_params(key, in_dim, edge_dim, node_dim, num_layers):
    layers = []
    dim_in = in_dim
    for _ in range(num_layers):
        key, k1, k2 = jax.random.split(key, 3)
        w1, b1 = init_linear(k1, dim_in, edge_dim)    # lin_n2e
        w2, b2 = init_linear(k2, edge_dim, node_dim)  # lin_e2n
        layers.append(dict(w_n2e=w1, b_n2e=b1, w_e2n=w2, b_e2n=b2))
        dim_in = node_dim
    # nn.PReLU() default init: single shared parameter 0.25
    alpha_e = jnp.full((1,), 0.25, jnp.float32)
    alpha_n = jnp.full((1,), 0.25, jnp.float32)
    return dict(layers=layers, alpha_e=alpha_e, alpha_n=alpha_n)


def hyfi_forward(params, x, hyperedge_index, num_nodes=None, num_edges=None,
                 dropout_rate=0.0, noise_std_n=0.0,
                 tile_rows=512, tile_k=512):
    del dropout_rate, noise_std_n  # identity at the HyFi defaults (0.0)
    if num_nodes is None:
        num_nodes = int(hyperedge_index[0].max()) + 1
    if num_edges is None:
        num_edges = int(hyperedge_index[1].max()) + 1

    edge_dim = params["layers"][0]["w_n2e"].shape[1]
    node_dim = params["layers"][-1]["w_e2n"].shape[1]

    # Keep tile_rows == tile_k (default 512) so padding is one round-up, not an
    # lcm blowup.  On v7x keep the double-buffered working set (2x H tile +
    # 2x k-operand + output) well under 64 MiB VMEM and, for large problems,
    # make sure the row ("parallel") axis has >= 2 tiles to feed both TCs.
    row_mult = math.lcm(tile_rows, tile_k)
    n_pad = _round_up(max(num_nodes, 1), row_mult)
    e_pad = _round_up(max(num_edges, 1), row_mult)

    # Densify the ORIGINAL incidence only; the self-loop identity block of
    # H_full = [H | I_N] is handled analytically via the hoisted S term.
    H = jnp.zeros((n_pad, e_pad), jnp.float32)
    H = H.at[hyperedge_index[0], hyperedge_index[1]].add(1.0)
    Dn = jnp.sum(H, axis=1)                     # original node degrees
    De = jnp.sum(H, axis=0)                     # edge sizes
    node_valid = jnp.arange(n_pad) < num_nodes
    dn_inv = jnp.where(node_valid, 1.0 / (Dn + 1.0), 0.0).reshape(n_pad, 1)
    de_inv = jnp.where(De > 0, 1.0 / De, 0.0).reshape(e_pad, 1)
    H = H.astype(jnp.bfloat16)                  # exact for small integer counts
    HT = H.T                                    # materialized once, reused by all layers

    alpha_e = params["alpha_e"].reshape(1).astype(jnp.float32)
    alpha_n = params["alpha_n"].reshape(1).astype(jnp.float32)

    # pad feature dims to the 128-lane width (kept padded across layers)
    ed_pad = _round_up(edge_dim, _LANE)
    nd_pad = _round_up(node_dim, _LANE)
    in_pad = _round_up(x.shape[1], _LANE)

    n_feat = _pad2(x.astype(jnp.float32), n_pad, in_pad)

    E = None
    for layer in params["layers"]:
        d_in = n_feat.shape[1]
        w1p = _pad2(layer["w_n2e"], d_in, ed_pad).astype(jnp.bfloat16)
        b1p = _pad2(layer["b_n2e"], 1, ed_pad)
        w2p = _pad2(layer["w_e2n"], ed_pad, nd_pad).astype(jnp.bfloat16)
        b2p = _pad2(layer["b_e2n"], 1, nd_pad)

        # ---- hoisted projections (done ONCE per layer, outside the grids) ----
        xw = jnp.dot(n_feat.astype(jnp.bfloat16), w1p,
                     preferred_element_type=jnp.float32) + b1p       # (n_pad, ed_pad)
        e_self = jnp.where(xw > 0, xw, alpha_e * xw)                 # self-loop edge emb
        s = jnp.dot(e_self.astype(jnp.bfloat16), w2p,
                    preferred_element_type=jnp.float32) + b2p        # (n_pad, nd_pad)

        # ---- stage A: node -> edge (streams H^T + bf16 XW) ----
        E = edge_stage(HT, xw.astype(jnp.bfloat16), de_inv, alpha_e,
                       tile_e=tile_rows, tile_kn=tile_k)

        # ---- hoisted edge projection ----
        ew = jnp.dot(E.astype(jnp.bfloat16), w2p,
                     preferred_element_type=jnp.float32) + b2p       # (e_pad, nd_pad)

        # ---- stage B: edge -> node (streams H + bf16 EW, init from S) ----
        n_feat = node_stage(H, ew.astype(jnp.bfloat16), s, dn_inv, alpha_n,
                            tile_n=tile_rows, tile_ke=tile_k)

    # slice off row and feature padding only at the very end
    return n_feat[:num_nodes, :node_dim], E[:num_edges, :edge_dim]


# --------------------------------- main ------------------------------------ #

if __name__ == "__main__":
    key = jax.random.PRNGKey(0)

    num_nodes = 8
    num_edges = 4
    in_dim, edge_dim, node_dim = 16, 32, 32
    num_layers = 2
    # fc1/fc2 projection heads exist on HyFi but are not used in HyFi.forward

    kx, kp = jax.random.split(key)
    x = jax.random.normal(kx, (num_nodes, in_dim), jnp.float32)

    # deterministic hypergraph: 4 hyperedges over 8 nodes (+extra memberships)
    hyperedge_index = jnp.array(
        [[0, 1, 2, 3, 4, 5, 6, 7, 0, 2, 4, 6],
         [0, 0, 1, 1, 2, 2, 3, 3, 1, 3, 0, 2]], dtype=jnp.int32)

    params = init_hyfi_params(kp, in_dim, edge_dim, node_dim, num_layers)

    n_out, e_out = hyfi_forward(params, x, hyperedge_index,
                                num_nodes=num_nodes, num_edges=num_edges,
                                dropout_rate=0.0, noise_std_n=0.0)
    n_out = jax.block_until_ready(n_out)
    e_out = jax.block_until_ready(e_out)

    assert n_out.shape == (num_nodes, node_dim), n_out.shape
    assert e_out.shape == (num_edges, edge_dim), e_out.shape
    assert bool(jnp.all(jnp.isfinite(n_out))) and bool(jnp.all(jnp.isfinite(e_out)))

    print("KERNEL_OK")
</pallas_src>

<mosaic_0001>
module attributes {stable_mosaic.version = 11 : i64} {
  func.func @edge_stage_kernel(%arg0: i32, %arg1: i32, %arg2: memref<512x512xbf16, #tpu.memory_space<vmem>>, %arg3: memref<512x128xbf16, #tpu.memory_space<vmem>>, %arg4: memref<512x1xf32, #tpu.memory_space<vmem>>, %arg5: memref<1xf32, #tpu.memory_space<smem>>, %arg6: memref<512x128xf32, #tpu.memory_space<vmem>>) attributes {dimension_semantics = [#tpu.dimension_semantics<parallel>, #tpu.dimension_semantics<arbitrary>], iteration_bounds = array<i64: 1, 1>, scalar_prefetch = 0 : i64, scratch_operands = 0 : i64, tpu.core_type = #tpu.core_type<tc>, window_params = [{transform_indices = @transform_0, window_bounds = array<i64: 512, 512>}, {transform_indices = @transform_1, window_bounds = array<i64: 512, 128>}, {transform_indices = @transform_2, window_bounds = array<i64: 512, 1>}, {transform_indices = @transform_3, window_bounds = array<i64: 1>}, {transform_indices = @transform_4, window_bounds = array<i64: 512, 128>}]} {
    %c0_i32 = arith.constant 0 : i32
    %0 = arith.cmpi eq, %arg1, %c0_i32 : i32
    %1 = arith.extui %0 : i1 to i32
    %c0_i32_0 = arith.constant 0 : i32
    %2 = arith.cmpi ne, %1, %c0_i32_0 : i32
    scf.if %2 {
      %cst_10 = arith.constant 0.000000e+00 : f32
      %12 = vector.broadcast %cst_10 : f32 to vector<512x128xf32>
      %c0_11 = arith.constant 0 : index
      %c0_12 = arith.constant 0 : index
      %13 = vector.load %arg6[%c0_11, %c0_12] : memref<512x128xf32, #tpu.memory_space<vmem>>, vector<512x128xf32>
      tpu.vector_store %arg6[%c0_11, %c0_12], %12 {strides = array<i32>} : memref<512x128xf32, #tpu.memory_space<vmem>>, vector<512x128xf32>,
    } else {
    }
    %c0 = arith.constant 0 : index
    %c0_1 = arith.constant 0 : index
    %3 = vector.load %arg6[%c0, %c0_1] : memref<512x128xf32, #tpu.memory_space<vmem>>, vector<512x128xf32>
    %c0_2 = arith.constant 0 : index
    %c0_3 = arith.constant 0 : index
    %4 = vector.load %arg2[%c0_2, %c0_3] : memref<512x512xbf16, #tpu.memory_space<vmem>>, vector<512x512xbf16>
    %c0_4 = arith.constant 0 : index
    %c0_5 = arith.constant 0 : index
    %5 = vector.load %arg3[%c0_4, %c0_5] : memref<512x128xbf16, #tpu.memory_space<vmem>>, vector<512x128xbf16>
    %cst = arith.constant dense<0.000000e+00> : vector<512x128xf32>
    %6 = tpu.matmul %4, %5, %cst {dimension_numbers = #tpu.dot_dimension_numbers<[1], [0], [0], [1], [0, 0, 1, 1], [], []>} : vector<512x512xbf16>, vector<512x128xbf16>, vector<512x128xf32> -> vector<512x128xf32>
    %7 = arith.addf %3, %6 : vector<512x128xf32>
    %c0_6 = arith.constant 0 : index
    %c0_7 = arith.constant 0 : index
    %8 = vector.load %arg6[%c0_6, %c0_7] : memref<512x128xf32, #tpu.memory_space<vmem>>, vector<512x128xf32>
    tpu.vector_store %arg6[%c0_6, %c0_7], %7 {strides = array<i32>} : memref<512x128xf32, #tpu.memory_space<vmem>>, vector<512x128xf32>,
    %c0_i32_8 = arith.constant 0 : i32
    %9 = arith.cmpi eq, %arg1, %c0_i32_8 : i32
    %10 = arith.extui %9 : i1 to i32
    %c0_i32_9 = arith.constant 0 : i32
    %11 = arith.cmpi ne, %10, %c0_i32_9 : i32
    scf.if %11 {
      %c0_10 = arith.constant 0 : index
      %c0_11 = arith.constant 0 : index
      %12 = vector.load %arg4[%c0_10, %c0_11] : memref<512x1xf32, #tpu.memory_space<vmem>>, vector<512x1xf32>
      %c0_12 = arith.constant 0 : index
      %c0_13 = arith.constant 0 : index
      %13 = vector.load %arg6[%c0_12, %c0_13] : memref<512x128xf32, #tpu.memory_space<vmem>>, vector<512x128xf32>
      %14 = vector.broadcast %12 : vector<512x1xf32> to vector<512x128xf32>
      %15 = arith.mulf %14, %13 : vector<512x128xf32>
      %c0_14 = arith.constant 0 : index
      %16 = memref.load %arg5[%c0_14] : memref<1xf32, #tpu.memory_space<smem>>
      %cst_15 = arith.constant 0.000000e+00 : f32
      %17 = vector.broadcast %cst_15 : f32 to vector<512x128xf32>
      %18 = arith.cmpf ogt, %15, %17 : vector<512x128xf32>
      %19 = vector.broadcast %16 : f32 to vector<512x128xf32>
      %20 = arith.mulf %19, %15 : vector<512x128xf32>
      %21 = arith.select %18, %15, %20 : vector<512x128xi1>, vector<512x128xf32>
      %c0_16 = arith.constant 0 : index
      %c0_17 = arith.constant 0 : index
      %22 = vector.load %arg6[%c0_16, %c0_17] : memref<512x128xf32, #tpu.memory_space<vmem>>, vector<512x128xf32>
      tpu.vector_store %arg6[%c0_16, %c0_17], %21 {strides = array<i32>} : memref<512x128xf32, #tpu.memory_space<vmem>>, vector<512x128xf32>,
    } else {
    }
    return
  }
  func.func @transform_0(%arg0: i32, %arg1: i32) -> (i32, i32) {
    %c0_i32 = arith.constant 0 : i32
    return %arg0, %arg1 : i32, i32
  }
  func.func @transform_1(%arg0: i32, %arg1: i32) -> (i32, i32) {
    %c0_i32 = arith.constant 0 : i32
    %c0_i32_0 = arith.constant 0 : i32
    return %arg1, %c0_i32 : i32, i32
  }
  func.func @transform_2(%arg0: i32, %arg1: i32) -> (i32, i32) {
    %c0_i32 = arith.constant 0 : i32
    %c0_i32_0 = arith.constant 0 : i32
    return %arg0, %c0_i32 : i32, i32
  }
  func.func @transform_3(%arg0: i32, %arg1: i32) -> i32 {
    %c0_i32 = arith.constant 0 : i32
    %c0_i32_0 = arith.constant 0 : i32
    return %c0_i32 : i32
  }
  func.func @transform_4(%arg0: i32, %arg1: i32) -> (i32, i32) {
    %c0_i32 = arith.constant 0 : i32
    %c0_i32_0 = arith.constant 0 : i32
    return %arg0, %c0_i32 : i32, i32
  }
}

</mosaic_0001>

<llo_original>
// kernel: tpu_custom_call.1
$region0: #{tpu_custom_call.1}
  #allocation0 [shape = 'u32[]', space=smem, size = 0x4, offset = 0x4, fixed_abs, tag = 'smem constant byte address 0x4 - core index']
  #allocation1 [shape = 'u32[72,128]{1,0:T(1,128)}', space=vmem, size = 0x9000, scoped, tag = 'internal scratch']
  #allocation2 [shape = 'f32[1]{0:T(128)S(6)}', space=smem, size = 0x200, scoped, tag = 'scoped memory for tpu_custom_call.1']
  %s0 = inlined_call_operand.hbm [shape: bf16[512,512], index: 0, kind: input, shape index: {}]
  %s1 = inlined_call_operand.vmem [shape: bf16[512,128], index: 1, kind: input, shape index: {}]
  %s2 = inlined_call_operand.vmem [shape: f32[512,1], index: 2, kind: input, shape index: {}]
  %s3 = inlined_call_operand.<no memory space> [shape: f32[1], index: 3, kind: input, shape index: {}]
  %s4 = inlined_call_operand.hbm [shape: f32[512,128], index: 4, kind: output, shape index: {}]
  %s5 = sld [smem:[#allocation0]]
  $region38: #{tpu_custom_call.1} parent=0
    _
  %s7 = ssub.s32 1, %s5
  %s8 = scalar_select 0, %s7, %s5
  %9 = sst [smem:[#allocation2]] %s3
  $region1: #{tpu_custom_call.1} parent=0
    #allocation3 [shape = 'u8[524288]{0}', space=vmem, size = 0x80000, scoped, tag = 'input window, operand 0, single buffered']
    #allocation4 [shape = 's32[1]{0}', space=sflag, size = 0x4, scoped, tag = 'scoped memory for tpu_custom_call.1']
    #allocation5 [shape = 's32[1]{0}', space=sflag, size = 0x4, scoped, tag = 'scoped memory for tpu_custom_call.1']
    #allocation6 [shape = 'u8[262144]{0}', space=vmem, size = 0x40000, scoped, tag = 'output window, operand 0, single buffered']
    %10 = vsyncpa [#allocation4], 0
    %11 = vsyncpa [#allocation5], 0
    // Predicated region
    $region2: #{tpu_custom_call.1} parent=1 // pred_check
      _
    $region3: #{tpu_custom_call.1} parent=1 // pred_check_branch
      %13 = sbr.rel (0) target = $region5
    $region4: #{tpu_custom_call.1} parent=1 // pred_region
      %15 = vsyncadd [#allocation4], 0
      %s16 = sshll.u32 %s0, 4
      %s17 = int_to_ptr.hbm [resolvable:$true] %s16
      %s18 = sshll.u32 [#allocation3], 4
      %s19 = int_to_ptr.vmem [resolvable:$true] %s18
      %24 = dma.hbm_to_vmem [thread:$0]  %s17, 16384, %s19, [#allocation4], 256, 256, 16
    $region5: #{tpu_custom_call.1} parent=1 // pred_fallthru
      _
    // Predicated region
    $region6: #{tpu_custom_call.1} parent=1 // pred_check
      _
    $region7: #{tpu_custom_call.1} parent=1 // pred_check_branch
      %26 = sbr.rel (0) target = $region9
    $region8: #{tpu_custom_call.1} parent=1 // pred_region
      _
    $region9: #{tpu_custom_call.1} parent=1 // pred_fallthru
      _
    // Predicated region
    $region10: #{tpu_custom_call.1} parent=1 // pred_check
      _
    $region11: #{tpu_custom_call.1} parent=1 // pred_check_branch
      %28 = sbr.rel (0) target = $region13
    $region12: #{tpu_custom_call.1} parent=1 // pred_region
      _
    $region13: #{tpu_custom_call.1} parent=1 // pred_fallthru
      _
    // Predicated region
    $region14: #{tpu_custom_call.1} parent=1 // pred_check
      _
    $region15: #{tpu_custom_call.1} parent=1 // pred_check_branch
      %30 = sbr.rel (0) target = $region17
    $region16: #{tpu_custom_call.1} parent=1 // pred_region
      _
    $region17: #{tpu_custom_call.1} parent=1 // pred_fallthru
      _
    // Predicated region
    $region18: #{tpu_custom_call.1} parent=1 // pred_check
      _
    $region19: #{tpu_custom_call.1} parent=1 // pred_check_branch
      %32 = sbr.rel (0) target = $region21
    $region20: #{tpu_custom_call.1} parent=1 // pred_region
      %34 = dma.done [#allocation4], 16384
    $region21: #{tpu_custom_call.1} parent=1 // pred_fallthru
      _
    %p35 = scmp.eq.s32.totalorder 0, 0
    // Predicated region
    $region22: #{tpu_custom_call.1} parent=1 // pred_check
      %p36 = pneg %p35
    $region23: #{tpu_custom_call.1} parent=1 // pred_check_branch
      %38 = sbr.rel (%p36) target = $region25
    $region24: #{tpu_custom_call.1} parent=1 // pred_region
      %39 = vst [vmem:[#allocation6] sm:$0xff] 0.0
      %40 = vst [vmem:[#allocation6 + $0x8] sm:$0xff] 0.0
      %41 = vst [vmem:[#allocation6 + $0x10] sm:$0xff] 0.0
      %42 = vst [vmem:[#allocation6 + $0x18] sm:$0xff] 0.0
      %43 = vst [vmem:[#allocation6 + $0x20] sm:$0xff] 0.0
      %44 = vst [vmem:[#allocation6 + $0x28] sm:$0xff] 0.0
      %45 = vst [vmem:[#allocation6 + $0x30] sm:$0xff] 0.0
      %46 = vst [vmem:[#allocation6 + $0x38] sm:$0xff] 0.0
      %47 = vst [vmem:[#allocation6 + $0x40] sm:$0xff] 0.0
      %48 = vst [vmem:[#allocation6 + $0x48] sm:$0xff] 0.0
      %49 = vst [vmem:[#allocation6 + $0x50] sm:$0xff] 0.0
      %50 = vst [vmem:[#allocation6 + $0x58] sm:$0xff] 0.0
      %51 = vst [vmem:[#allocation6 + $0x60] sm:$0xff] 0.0
      %52 = vst [vmem:[#allocation6 + $0x68] sm:$0xff] 0.0
      %53 = vst [vmem:[#allocation6 + $0x70] sm:$0xff] 0.0
      %54 = vst [vmem:[#allocation6 + $0x78] sm:$0xff] 0.0
      %55 = vst [vmem:[#allocation6 + $0x80] sm:$0xff] 0.0
      %56 = vst [vmem:[#allocation6 + $0x88] sm:$0xff] 0.0
      %57 = vst [vmem:[#allocation6 + $0x90] sm:$0xff] 0.0
      %58 = vst [vmem:[#allocation6 + $0x98] sm:$0xff] 0.0
      %59 = vst [vmem:[#allocation6 + $0xa0] sm:$0xff] 0.0
      %60 = vst [vmem:[#allocation6 + $0xa8] sm:$0xff] 0.0
      %61 = vst [vmem:[#allocation6 + $0xb0] sm:$0xff] 0.0
      %62 = vst [vmem:[#allocation6 + $0xb8] sm:$0xff] 0.0
      %63 = vst [vmem:[#allocation6 + $0xc0] sm:$0xff] 0.0
      %64 = vst [vmem:[#allocation6 + $0xc8] sm:$0xff] 0.0
      %65 = vst [vmem:[#allocation6 + $0xd0] sm:$0xff] 0.0
      %66 = vst [vmem:[#allocation6 + $0xd8] sm:$0xff] 0.0
      %67 = vst [vmem:[#allocation6 + $0xe0] sm:$0xff] 0.0
      %68 = vst [vmem:[#allocation6 + $0xe8] sm:$0xff] 0.0
      %69 = vst [vmem:[#allocation6 + $0xf0] sm:$0xff] 0.0
      %70 = vst [vmem:[#allocation6 + $0xf8] sm:$0xff] 0.0
      %71 = vst [vmem:[#allocation6 + $0x100] sm:$0xff] 0.0
      %72 = vst [vmem:[#allocation6 + $0x108] sm:$0xff] 0.0
      %73 = vst [vmem:[#allocation6 + $0x110] sm:$0xff] 0.0
      %74 = vst [vmem:[#allocation6 + $0x118] sm:$0xff] 0.0
      %75 = vst [vmem:[#allocation6 + $0x120] sm:$0xff] 0.0
      %76 = vst [vmem:[#allocation6 + $0x128] sm:$0xff] 0.0
      %77 = vst [vmem:[#allocation6 + $0x130] sm:$0xff] 0.0
      %78 = vst [vmem:[#allocation6 + $0x138] sm:$0xff] 0.0
      %79 = vst [vmem:[#allocation6 + $0x140] sm:$0xff] 0.0
      %80 = vst [vmem:[#allocation6 + $0x148] sm:$0xff] 0.0
      %81 = vst [vmem:[#allocation6 + $0x150] sm:$0xff] 0.0
      %82 = vst [vmem:[#allocation6 + $0x158] sm:$0xff] 0.0
      %83 = vst [vmem:[#allocation6 + $0x160] sm:$0xff] 0.0
      %84 = vst [vmem:[#allocation6 + $0x168] sm:$0xff] 0.0
      %85 = vst [vmem:[#allocation6 + $0x170] sm:$0xff] 0.0
      %86 = vst [vmem:[#allocation6 + $0x178] sm:$0xff] 0.0
      %87 = vst [vmem:[#allocation6 + $0x180] sm:$0xff] 0.0
      %88 = vst [vmem:[#allocation6 + $0x188] sm:$0xff] 0.0
      %89 = vst [vmem:[#allocation6 + $0x190] sm:$0xff] 0.0
      %90 = vst [vmem:[#allocation6 + $0x198] sm:$0xff] 0.0
      %91 = vst [vmem:[#allocation6 + $0x1a0] sm:$0xff] 0.0
      %92 = vst [vmem:[#allocation6 + $0x1a8] sm:$0xff] 0.0
      %93 = vst [vmem:[#allocation6 + $0x1b0] sm:$0xff] 0.0
      %94 = vst [vmem:[#allocation6 + $0x1b8] sm:$0xff] 0.0
      %95 = vst [vmem:[#allocation6 + $0x1c0] sm:$0xff] 0.0
      %96 = vst [vmem:[#allocation6 + $0x1c8] sm:$0xff] 0.0
      %97 = vst [vmem:[#allocation6 + $0x1d0] sm:$0xff] 0.0
      %98 = vst [vmem:[#allocation6 + $0x1d8] sm:$0xff] 0.0
      %99 = vst [vmem:[#allocation6 + $0x1e0] sm:$0xff] 0.0
      %100 = vst [vmem:[#allocation6 + $0x1e8] sm:$0xff] 0.0
      %101 = vst [vmem:[#allocation6 + $0x1f0] sm:$0xff] 0.0
      %102 = vst [vmem:[#allocation6 + $0x1f8] sm:$0xff] 0.0
    $region25: #{tpu_custom_call.1} parent=1 // pred_fallthru
      _
    %v103 = vld [vmem:[#allocation6] sm:$0xff]
    %v104 = vld [vmem:[#allocation6 + $0x8] sm:$0xff]
    %v105 = vld [vmem:[#allocation6 + $0x10] sm:$0xff]
    %v106 = vld [vmem:[#allocation6 + $0x18] sm:$0xff]
    %v107 = vld [vmem:[#allocation6 + $0x20] sm:$0xff]
    %v108 = vld [vmem:[#allocation6 + $0x28] sm:$0xff]
    %v109 = vld [vmem:[#allocation6 + $0x30] sm:$0xff]
    %v110 = vld [vmem:[#allocation6 + $0x38] sm:$0xff]
    %v111 = vld [vmem:[#allocation6 + $0x40] sm:$0xff]
    %v112 = vld [vmem:[#allocation6 + $0x48] sm:$0xff]
    %v113 = vld [vmem:[#allocation6 + $0x50] sm:$0xff]
    %v114 = vld [vmem:[#allocation6 + $0x58] sm:$0xff]
    %v115 = vld [vmem:[#allocation6 + $0x60] sm:$0xff]
    %v116 = vld [vmem:[#allocation6 + $0x68] sm:$0xff]
    %v117 = vld [vmem:[#allocation6 + $0x70] sm:$0xff]
    %v118 = vld [vmem:[#allocation6 + $0x78] sm:$0xff]
    %v119 = vld [vmem:[#allocation6 + $0x80] sm:$0xff]
    %v120 = vld [vmem:[#allocation6 + $0x88] sm:$0xff]
    %v121 = vld [vmem:[#allocation6 + $0x90] sm:$0xff]
    %v122 = vld [vmem:[#allocation6 + $0x98] sm:$0xff]
    %v123 = vld [vmem:[#allocation6 + $0xa0] sm:$0xff]
    %v124 = vld [vmem:[#allocation6 + $0xa8] sm:$0xff]
    %v125 = vld [vmem:[#allocation6 + $0xb0] sm:$0xff]
    %v126 = vld [vmem:[#allocation6 + $0xb8] sm:$0xff]
    %v127 = vld [vmem:[#allocation6 + $0xc0] sm:$0xff]
    %v128 = vld [vmem:[#allocation6 + $0xc8] sm:$0xff]
    %v129 = vld [vmem:[#allocation6 + $0xd0] sm:$0xff]
    %v130 = vld [vmem:[#allocation6 + $0xd8] sm:$0xff]
    %v131 = vld [vmem:[#allocation6 + $0xe0] sm:$0xff]
    %v132 = vld [vmem:[#allocation6 + $0xe8] sm:$0xff]
    %v133 = vld [vmem:[#allocation6 + $0xf0] sm:$0xff]
    %v134 = vld [vmem:[#allocation6 + $0xf8] sm:$0xff]
    %v135 = vld [vmem:[#allocation6 + $0x100] sm:$0xff]
    %v136 = vld [vmem:[#allocation6 + $0x108] sm:$0xff]
    %v137 = vld [vmem:[#allocation6 + $0x110] sm:$0xff]
    %v138 = vld [vmem:[#allocation6 + $0x118] sm:$0xff]
    %v139 = vld [vmem:[#allocation6 + $0x120] sm:$0xff]
    %v140 = vld [vmem:[#allocation6 + $0x128] sm:$0xff]
    %v141 = vld [vmem:[#allocation6 + $0x130] sm:$0xff]
    %v142 = vld [vmem:[#allocation6 + $0x138] sm:$0xff]
    %v143 = vld [vmem:[#allocation6 + $0x140] sm:$0xff]
    %v144 = vld [vmem:[#allocation6 + $0x148] sm:$0xff]
    %v145 = vld [vmem:[#allocation6 + $0x150] sm:$0xff]
    %v146 = vld [vmem:[#allocation6 + $0x158] sm:$0xff]
    %v147 = vld [vmem:[#allocation6 + $0x160] sm:$0xff]
    %v148 = vld [vmem:[#allocation6 + $0x168] sm:$0xff]
    %v149 = vld [vmem:[#allocation6 + $0x170] sm:$0xff]
    %v150 = vld [vmem:[#allocation6 + $0x178] sm:$0xff]
    %v151 = vld [vmem:[#allocation6 + $0x180] sm:$0xff]
    %v152 = vld [vmem:[#allocation6 + $0x188] sm:$0xff]
    %v153 = vld [vmem:[#allocation6 + $0x190] sm:$0xff]
    %v154 = vld [vmem:[#allocation6 + $0x198] sm:$0xff]
    %v155 = vld [vmem:[#allocation6 + $0x1a0] sm:$0xff]
    %v156 = vld [vmem:[#allocation6 + $0x1a8] sm:$0xff]
    %v157 = vld [vmem:[#allocation6 + $0x1b0] sm:$0xff]
    %v158 = vld [vmem:[#allocation6 + $0x1b8] sm:$0xff]
    %v159 = vld [vmem:[#allocation6 + $0x1c0] sm:$0xff]
    %v160 = vld [vmem:[#allocation6 + $0x1c8] sm:$0xff]
    %v161 = vld [vmem:[#allocation6 + $0x1d0] sm:$0xff]
    %v162 = vld [vmem:[#allocation6 + $0x1d8] sm:$0xff]
    %v163 = vld [vmem:[#allocation6 + $0x1e0] sm:$0xff]
    %v164 = vld [vmem:[#allocation6 + $0x1e8] sm:$0xff]
    %v165 = vld [vmem:[#allocation6 + $0x1f0] sm:$0xff]
    %v166 = vld [vmem:[#allocation6 + $0x1f8] sm:$0xff]
    %v167 = vld [vmem:[#allocation3] sm:$0xff]
    %v168 = vld [vmem:[#allocation3 + $0x8] sm:$0xff]
    %v169 = vld [vmem:[#allocation3 + $0x10] sm:$0xff]
    %v170 = vld [vmem:[#allocation3 + $0x18] sm:$0xff]
    %v171 = vld [vmem:[#allocation3 + $0x20] sm:$0xff]
    %v172 = vld [vmem:[#allocation3 + $0x28] sm:$0xff]
    %v173 = vld [vmem:[#allocation3 + $0x30] sm:$0xff]
    %v174 = vld [vmem:[#allocation3 + $0x38] sm:$0xff]
    %v175 = vld [vmem:[#allocation3 + $0x40] sm:$0xff]
    %v176 = vld [vmem:[#allocation3 + $0x48] sm:$0xff]
    %v177 = vld [vmem:[#allocation3 + $0x50] sm:$0xff]
    %v178 = vld [vmem:[#allocation3 + $0x58] sm:$0xff]
    %v179 = vld [vmem:[#allocation3 + $0x60] sm:$0xff]
    %v180 = vld [vmem:[#allocation3 + $0x68] sm:$0xff]
    %v181 = vld [vmem:[#allocation3 + $0x70] sm:$0xff]
    %v182 = vld [vmem:[#allocation3 + $0x78] sm:$0xff]
    %v183 = vld [vmem:[#allocation3 + $0x80] sm:$0xff]
    %v184 = vld [vmem:[#allocation3 + $0x88] sm:$0xff]
    %v185 = vld [vmem:[#allocation3 + $0x90] sm:$0xff]
    %v186 = vld [vmem:[#allocation3 + $0x98] sm:$0xff]
    %v187 = vld [vmem:[#allocation3 + $0xa0] sm:$0xff]
    %v188 = vld [vmem:[#allocation3 + $0xa8] sm:$0xff]
    %v189 = vld [vmem:[#allocation3 + $0xb0] sm:$0xff]
    %v190 = vld [vmem:[#allocation3 + $0xb8] sm:$0xff]
    %v191 = vld [vmem:[#allocation3 + $0xc0] sm:$0xff]
    %v192 = vld [vmem:[#allocation3 + $0xc8] sm:$0xff]
    %v193 = vld [vmem:[#allocation3 + $0xd0] sm:$0xff]
    %v194 = vld [vmem:[#allocation3 + $0xd8] sm:$0xff]
    %v195 = vld [vmem:[#allocation3 + $0xe0] sm:$0xff]
    %v196 = vld [vmem:[#allocation3 + $0xe8] sm:$0xff]
    %v197 = vld [vmem:[#allocation3 + $0xf0] sm:$0xff]
    %v198 = vld [vmem:[#allocation3 + $0xf8] sm:$0xff]
    %v199 = vld [vmem:[#allocation3 + $0x100] sm:$0xff]
    %v200 = vld [vmem:[#allocation3 + $0x108] sm:$0xff]
    %v201 = vld [vmem:[#allocation3 + $0x110] sm:$0xff]
    %v202 = vld [vmem:[#allocation3 + $0x118] sm:$0xff]
    %v203 = vld [vmem:[#allocation3 + $0x120] sm:$0xff]
    %v204 = vld [vmem:[#allocation3 + $0x128] sm:$0xff]
    %v205 = vld [vmem:[#allocation3 + $0x130] sm:$0xff]
    %v206 = vld [vmem:[#allocation3 + $0x138] sm:$0xff]
    %v207 = vld [vmem:[#allocation3 + $0x140] sm:$0xff]
    %v208 = vld [vmem:[#allocation3 + $0x148] sm:$0xff]
    %v209 = vld [vmem:[#allocation3 + $0x150] sm:$0xff]
    %v210 = vld [vmem:[#allocation3 + $0x158] sm:$0xff]
    %v211 = vld [vmem:[#allocation3 + $0x160] sm:$0xff]
    %v212 = vld [vmem:[#allocation3 + $0x168] sm:$0xff]
    %v213 = vld [vmem:[#allocation3 + $0x170] sm:$0xff]
    %v214 = vld [vmem:[#allocation3 + $0x178] sm:$0xff]
    %v215 = vld [vmem:[#allocation3 + $0x180] sm:$0xff]
    %v216 = vld [vmem:[#allocation3 + $0x188] sm:$0xff]
    %v217 = vld [vmem:[#allocation3 + $0x190] sm:$0xff]
    %v218 = vld [vmem:[#allocation3 + $0x198] sm:$0xff]
    %v219 = vld [vmem:[#allocation3 + $0x1a0] sm:$0xff]
    %v220 = vld [vmem:[#allocation3 + $0x1a8] sm:$0xff]
    %v221 = vld [vmem:[#allocation3 + $0x1b0] sm:$0xff]
    %v222 = vld [vmem:[#allocation3 + $0x1b8] sm:$0xff]
    %v223 = vld [vmem:[#allocation3 + $0x1c0] sm:$0xff]
    %v224 = vld [vmem:[#allocation3 + $0x1c8] sm:$0xff]
    %v225 = vld [vmem:[#allocation3 + $0x1d0] sm:$0xff]
    %v226 = vld [vmem:[#allocation3 + $0x1d8] sm:$0xff]
    %v227 = vld [vmem:[#allocation3 + $0x1e0] sm:$0xff]
    %v228 = vld [vmem:[#allocation3 + $0x1e8] sm:$0xff]
    %v229 = vld [vmem:[#allocation3 + $0x1f0] sm:$0xff]
    %v230 = vld [vmem:[#allocation3 + $0x1f8] sm:$0xff]
    %v231 = vld [vmem:[#allocation3 + $0x200] sm:$0xff]
    %v232 = vld [vmem:[#allocation3 + $0x208] sm:$0xff]
    %v233 = vld [vmem:[#allocation3 + $0x210] sm:$0xff]
    %v234 = vld [vmem:[#allocation3 + $0x218] sm:$0xff]
    %v235 = vld [vmem:[#allocation3 + $0x220] sm:$0xff]
    %v236 = vld [vmem:[#allocation3 + $0x228] sm:$0xff]
    %v237 = vld [vmem:[#allocation3 + $0x230] sm:$0xff]
    %v238 = vld [vmem:[#allocation3 + $0x238] sm:$0xff]
    %v239 = vld [vmem:[#allocation3 + $0x240] sm:$0xff]
    %v240 = vld [vmem:[#allocation3 + $0x248] sm:$0xff]
    %v241 = vld [vmem:[#allocation3 + $0x250] sm:$0xff]
    %v242 = vld [vmem:[#allocation3 + $0x258] sm:$0xff]
    %v243 = vld [vmem:[#allocation3 + $0x260] sm:$0xff]
    %v244 = vld [vmem:[#allocation3 + $0x268] sm:$0xff]
    %v245 = vld [vmem:[#allocation3 + $0x270] sm:$0xff]
    %v246 = vld [vmem:[#allocation3 + $0x278] sm:$0xff]
    %v247 = vld [vmem:[#allocation3 + $0x280] sm:$0xff]
    %v248 = vld [vmem:[#allocation3 + $0x288] sm:$0xff]
    %v249 = vld [vmem:[#allocation3 + $0x290] sm:$0xff]
    %v250 = vld [vmem:[#allocation3 + $0x298] sm:$0xff]
    %v251 = vld [vmem:[#allocation3 + $0x2a0] sm:$0xff]
    %v252 = vld [vmem:[#allocation3 + $0x2a8] sm:$0xff]
    %v253 = vld [vmem:[#allocation3 + $0x2b0] sm:$0xff]
    %v254 = vld [vmem:[#allocation3 + $0x2b8] sm:$0xff]
    %v255 = vld [vmem:[#allocation3 + $0x2c0] sm:$0xff]
    %v256 = vld [vmem:[#allocation3 + $0x2c8] sm:$0xff]
    %v257 = vld [vmem:[#allocation3 + $0x2d0] sm:$0xff]
    %v258 = vld [vmem:[#allocation3 + $0x2d8] sm:$0xff]
    %v259 = vld [vmem:[#allocation3 + $0x2e0] sm:$0xff]
    %v260 = vld [vmem:[#allocation3 + $0x2e8] sm:$0xff]
    %v261 = vld [vmem:[#allocation3 + $0x2f0] sm:$0xff]
    %v262 = vld [vmem:[#allocation3 + $0x2f8] sm:$0xff]
    %v263 = vld [vmem:[#allocation3 + $0x300] sm:$0xff]
    %v264 = vld [vmem:[#allocation3 + $0x308] sm:$0xff]
    %v265 = vld [vmem:[#allocation3 + $0x310] sm:$0xff]
    %v266 = vld [vmem:[#allocation3 + $0x318] sm:$0xff]
    %v267 = vld [vmem:[#allocation3 + $0x320] sm:$0xff]
    %v268 = vld [vmem:[#allocation3 + $0x328] sm:$0xff]
    %v269 = vld [vmem:[#allocation3 + $0x330] sm:$0xff]
    %v270 = vld [vmem:[#allocation3 + $0x338] sm:$0xff]
    %v271 = vld [vmem:[#allocation3 + $0x340] sm:$0xff]
    %v272 = vld [vmem:[#allocation3 + $0x348] sm:$0xff]
    %v273 = vld [vmem:[#allocation3 + $0x350] sm:$0xff]
    %v274 = vld [vmem:[#allocation3 + $0x358] sm:$0xff]
    %v275 = vld [vmem:[#allocation3 + $0x360] sm:$0xff]
    %v276 = vld [vmem:[#allocation3 + $0x368] sm:$0xff]
    %v277 = vld [vmem:[#allocation3 + $0x370] sm:$0xff]
    %v278 = vld [vmem:[#allocation3 + $0x378] sm:$0xff]
    %v279 = vld [vmem:[#allocation3 + $0x380] sm:$0xff]
    %v280 = vld [vmem:[#allocation3 + $0x388] sm:$0xff]
    %v281 = vld [vmem:[#allocation3 + $0x390] sm:$0xff]
    %v282 = vld [vmem:[#allocation3 + $0x398] sm:$0xff]
    %v283 = vld [vmem:[#allocation3 + $0x3a0] sm:$0xff]
    %v284 = vld [vmem:[#allocation3 + $0x3a8] sm:$0xff]
    %v285 = vld [vmem:[#allocation3 + $0x3b0] sm:$0xff]
    %v286 = vld [vmem:[#allocation3 + $0x3b8] sm:$0xff]
    %v287 = vld [vmem:[#allocation3 + $0x3c0] sm:$0xff]
    %v288 = vld [vmem:[#allocation3 + $0x3c8] sm:$0xff]
    %v289 = vld [vmem:[#allocation3 + $0x3d0] sm:$0xff]
    %v290 = vld [vmem:[#allocation3 + $0x3d8] sm:$0xff]
    %v291 = vld [vmem:[#allocation3 + $0x3e0] sm:$0xff]
    %v292 = vld [vmem:[#allocation3 + $0x3e8] sm:$0xff]
    %v293 = vld [vmem:[#allocation3 + $0x3f0] sm:$0xff]
    %v294 = vld [vmem:[#allocation3 + $0x3f8] sm:$0xff]
    %v295 = vld [vmem:[%s1] sm:$0xf]
    %v296 = vld [vmem:[%s1 + $0x4] sm:$0xf]
    %v297 = vld [vmem:[%s1 + $0x8] sm:$0xf]
    %v298 = vld [vmem:[%s1 + $0xc] sm:$0xf]
    %v299 = vld [vmem:[%s1 + $0x10] sm:$0xf]
    %v300 = vld [vmem:[%s1 + $0x14] sm:$0xf]
    %v301 = vld [vmem:[%s1 + $0x18] sm:$0xf]
    %v302 = vld [vmem:[%s1 + $0x1c] sm:$0xf]
    %v303 = vld [vmem:[%s1 + $0x20] sm:$0xf]
    %v304 = vld [vmem:[%s1 + $0x24] sm:$0xf]
    %v305 = vld [vmem:[%s1 + $0x28] sm:$0xf]
    %v306 = vld [vmem:[%s1 + $0x2c] sm:$0xf]
    %v307 = vld [vmem:[%s1 + $0x30] sm:$0xf]
    %v308 = vld [vmem:[%s1 + $0x34] sm:$0xf]
    %v309 = vld [vmem:[%s1 + $0x38] sm:$0xf]
    %v310 = vld [vmem:[%s1 + $0x3c] sm:$0xf]
    %v311 = vld [vmem:[%s1 + $0x40] sm:$0xf]
    %v312 = vld [vmem:[%s1 + $0x44] sm:$0xf]
    %v313 = vld [vmem:[%s1 + $0x48] sm:$0xf]
    %v314 = vld [vmem:[%s1 + $0x4c] sm:$0xf]
    %v315 = vld [vmem:[%s1 + $0x50] sm:$0xf]
    %v316 = vld [vmem:[%s1 + $0x54] sm:$0xf]
    %v317 = vld [vmem:[%s1 + $0x58] sm:$0xf]
    %v318 = vld [vmem:[%s1 + $0x5c] sm:$0xf]
    %v319 = vld [vmem:[%s1 + $0x60] sm:$0xf]
    %v320 = vld [vmem:[%s1 + $0x64] sm:$0xf]
    %v321 = vld [vmem:[%s1 + $0x68] sm:$0xf]
    %v322 = vld [vmem:[%s1 + $0x6c] sm:$0xf]
    %v323 = vld [vmem:[%s1 + $0x70] sm:$0xf]
    %v324 = vld [vmem:[%s1 + $0x74] sm:$0xf]
    %v325 = vld [vmem:[%s1 + $0x78] sm:$0xf]
    %v326 = vld [vmem:[%s1 + $0x7c] sm:$0xf]
    %v327 = vld [vmem:[%s1 + $0x80] sm:$0xf]
    %v328 = vld [vmem:[%s1 + $0x84] sm:$0xf]
    %v329 = vld [vmem:[%s1 + $0x88] sm:$0xf]
    %v330 = vld [vmem:[%s1 + $0x8c] sm:$0xf]
    %v331 = vld [vmem:[%s1 + $0x90] sm:$0xf]
    %v332 = vld [vmem:[%s1 + $0x94] sm:$0xf]
    %v333 = vld [vmem:[%s1 + $0x98] sm:$0xf]
    %v334 = vld [vmem:[%s1 + $0x9c] sm:$0xf]
    %v335 = vld [vmem:[%s1 + $0xa0] sm:$0xf]
    %v336 = vld [vmem:[%s1 + $0xa4] sm:$0xf]
    %v337 = vld [vmem:[%s1 + $0xa8] sm:$0xf]
    %v338 = vld [vmem:[%s1 + $0xac] sm:$0xf]
    %v339 = vld [vmem:[%s1 + $0xb0] sm:$0xf]
    %v340 = vld [vmem:[%s1 + $0xb4] sm:$0xf]
    %v341 = vld [vmem:[%s1 + $0xb8] sm:$0xf]
    %v342 = vld [vmem:[%s1 + $0xbc] sm:$0xf]
    %v343 = vld [vmem:[%s1 + $0xc0] sm:$0xf]
    %v344 = vld [vmem:[%s1 + $0xc4] sm:$0xf]
    %v345 = vld [vmem:[%s1 + $0xc8] sm:$0xf]
    %v346 = vld [vmem:[%s1 + $0xcc] sm:$0xf]
    %v347 = vld [vmem:[%s1 + $0xd0] sm:$0xf]
    %v348 = vld [vmem:[%s1 + $0xd4] sm:$0xf]
    %v349 = vld [vmem:[%s1 + $0xd8] sm:$0xf]
    %v350 = vld [vmem:[%s1 + $0xdc] sm:$0xf]
    %v351 = vld [vmem:[%s1 + $0xe0] sm:$0xf]
    %v352 = vld [vmem:[%s1 + $0xe4] sm:$0xf]
    %v353 = vld [vmem:[%s1 + $0xe8] sm:$0xf]
    %v354 = vld [vmem:[%s1 + $0xec] sm:$0xf]
    %v355 = vld [vmem:[%s1 + $0xf0] sm:$0xf]
    %v356 = vld [vmem:[%s1 + $0xf4] sm:$0xf]
    %v357 = vld [vmem:[%s1 + $0xf8] sm:$0xf]
    %v358 = vld [vmem:[%s1 + $0xfc] sm:$0xf]
    %v487 = vunpack.c.l.b16 %v167
    %v488 = vunpack.c.h.b16 %v167
    %v489 = vunpack.c.l.b16 %v168
    %v490 = vunpack.c.h.b16 %v168
    %v491 = vunpack.c.l.b16 %v169
    %v492 = vunpack.c.h.b16 %v169
    %v493 = vunpack.c.l.b16 %v170
    %v494 = vunpack.c.h.b16 %v170
    %v495 = vunpack.c.l.b16 %v171
    %v496 = vunpack.c.h.b16 %v171
    %v497 = vunpack.c.l.b16 %v172
    %v498 = vunpack.c.h.b16 %v172
    %v499 = vunpack.c.l.b16 %v173
    %v500 = vunpack.c.h.b16 %v173
    %v501 = vunpack.c.l.b16 %v174
    %v502 = vunpack.c.h.b16 %v174
    %v503 = vunpack.c.l.b16 %v175
    %v504 = vunpack.c.h.b16 %v175
    %v505 = vunpack.c.l.b16 %v176
    %v506 = vunpack.c.h.b16 %v176
    %v507 = vunpack.c.l.b16 %v177
    %v508 = vunpack.c.h.b16 %v177
    %v509 = vunpack.c.l.b16 %v178
    %v510 = vunpack.c.h.b16 %v178
    %v511 = vunpack.c.l.b16 %v179
    %v512 = vunpack.c.h.b16 %v179
    %v513 = vunpack.c.l.b16 %v180
    %v514 = vunpack.c.h.b16 %v180
    %v515 = vunpack.c.l.b16 %v181
    %v516 = vunpack.c.h.b16 %v181
    %v517 = vunpack.c.l.b16 %v182
    %v518 = vunpack.c.h.b16 %v182
    %v519 = vunpack.c.l.b16 %v183
    %v520 = vunpack.c.h.b16 %v183
    %v521 = vunpack.c.l.b16 %v184
    %v522 = vunpack.c.h.b16 %v184
    %v523 = vunpack.c.l.b16 %v185
    %v524 = vunpack.c.h.b16 %v185
    %v525 = vunpack.c.l.b16 %v186
    %v526 = vunpack.c.h.b16 %v186
    %v527 = vunpack.c.l.b16 %v187
    %v528 = vunpack.c.h.b16 %v187
    %v529 = vunpack.c.l.b16 %v188
    %v530 = vunpack.c.h.b16 %v188
    %v531 = vunpack.c.l.b16 %v189
    %v532 = vunpack.c.h.b16 %v189
    %v533 = vunpack.c.l.b16 %v190
    %v534 = vunpack.c.h.b16 %v190
    %v535 = vunpack.c.l.b16 %v191
    %v536 = vunpack.c.h.b16 %v191
    %v537 = vunpack.c.l.b16 %v192
    %v538 = vunpack.c.h.b16 %v192
    %v539 = vunpack.c.l.b16 %v193
    %v540 = vunpack.c.h.b16 %v193
    %v541 = vunpack.c.l.b16 %v194
    %v542 = vunpack.c.h.b16 %v194
    %v543 = vunpack.c.l.b16 %v195
    %v544 = vunpack.c.h.b16 %v195
    %v545 = vunpack.c.l.b16 %v196
    %v546 = vunpack.c.h.b16 %v196
    %v547 = vunpack.c.l.b16 %v197
    %v548 = vunpack.c.h.b16 %v197
    %v549 = vunpack.c.l.b16 %v198
    %v550 = vunpack.c.h.b16 %v198
    %v551 = vunpack.c.l.b16 %v199
    %v552 = vunpack.c.h.b16 %v199
    %v553 = vunpack.c.l.b16 %v200
    %v554 = vunpack.c.h.b16 %v200
    %v555 = vunpack.c.l.b16 %v201
    %v556 = vunpack.c.h.b16 %v201
    %v557 = vunpack.c.l.b16 %v202
    %v558 = vunpack.c.h.b16 %v202
    %v559 = vunpack.c.l.b16 %v203
    %v560 = vunpack.c.h.b16 %v203
    %v561 = vunpack.c.l.b16 %v204
    %v562 = vunpack.c.h.b16 %v204
    %v563 = vunpack.c.l.b16 %v205
    %v564 = vunpack.c.h.b16 %v205
    %v565 = vunpack.c.l.b16 %v206
    %v566 = vunpack.c.h.b16 %v206
    %v567 = vunpack.c.l.b16 %v207
    %v568 = vunpack.c.h.b16 %v207
    %v569 = vunpack.c.l.b16 %v208
    %v570 = vunpack.c.h.b16 %v208
    %v571 = vunpack.c.l.b16 %v209
    %v572 = vunpack.c.h.b16 %v209
    %v573 = vunpack.c.l.b16 %v210
    %v574 = vunpack.c.h.b16 %v210
    %v575 = vunpack.c.l.b16 %v211
    %v576 = vunpack.c.h.b16 %v211
    %v577 = vunpack.c.l.b16 %v212
    %v578 = vunpack.c.h.b16 %v212
    %v579 = vunpack.c.l.b16 %v213
    %v580 = vunpack.c.h.b16 %v213
    %v581 = vunpack.c.l.b16 %v214
    %v582 = vunpack.c.h.b16 %v214
    %v583 = vunpack.c.l.b16 %v215
    %v584 = vunpack.c.h.b16 %v215
    %v585 = vunpack.c.l.b16 %v216
    %v586 = vunpack.c.h.b16 %v216
    %v587 = vunpack.c.l.b16 %v217
    %v588 = vunpack.c.h.b16 %v217
    %v589 = vunpack.c.l.b16 %v218
    %v590 = vunpack.c.h.b16 %v218
    %v591 = vunpack.c.l.b16 %v219
    %v592 = vunpack.c.h.b16 %v219
    %v593 = vunpack.c.l.b16 %v220
    %v594 = vunpack.c.h.b16 %v220
    %v595 = vunpack.c.l.b16 %v221
    %v596 = vunpack.c.h.b16 %v221
    %v597 = vunpack.c.l.b16 %v222
    %v598 = vunpack.c.h.b16 %v222
    %v599 = vunpack.c.l.b16 %v223
    %v600 = vunpack.c.h.b16 %v223
    %v601 = vunpack.c.l.b16 %v224
    %v602 = vunpack.c.h.b16 %v224
    %v603 = vunpack.c.l.b16 %v225
    %v604 = vunpack.c.h.b16 %v225
    %v605 = vunpack.c.l.b16 %v226
    %v606 = vunpack.c.h.b16 %v226
    %v607 = vunpack.c.l.b16 %v227
    %v608 = vunpack.c.h.b16 %v227
    %v609 = vunpack.c.l.b16 %v228
    %v610 = vunpack.c.h.b16 %v228
    %v611 = vunpack.c.l.b16 %v229
    %v612 = vunpack.c.h.b16 %v229
    %v613 = vunpack.c.l.b16 %v230
    %v614 = vunpack.c.h.b16 %v230
    %v615 = vunpack.c.l.b16 %v231
    %v616 = vunpack.c.h.b16 %v231
    %v617 = vunpack.c.l.b16 %v232
    %v618 = vunpack.c.h.b16 %v232
    %v619 = vunpack.c.l.b16 %v233
    %v620 = vunpack.c.h.b16 %v233
    %v621 = vunpack.c.l.b16 %v234
    %v622 = vunpack.c.h.b16 %v234
    %v623 = vunpack.c.l.b16 %v235
    %v624 = vunpack.c.h.b16 %v235
    %v625 = vunpack.c.l.b16 %v236
    %v626 = vunpack.c.h.b16 %v236
    %v627 = vunpack.c.l.b16 %v237
    %v628 = vunpack.c.h.b16 %v237
    %v629 = vunpack.c.l.b16 %v238
    %v630 = vunpack.c.h.b16 %v238
    %v631 = vunpack.c.l.b16 %v239
    %v632 = vunpack.c.h.b16 %v239
    %v633 = vunpack.c.l.b16 %v240
    %v634 = vunpack.c.h.b16 %v240
    %v635 = vunpack.c.l.b16 %v241
    %v636 = vunpack.c.h.b16 %v241
    %v637 = vunpack.c.l.b16 %v242
    %v638 = vunpack.c.h.b16 %v242
    %v639 = vunpack.c.l.b16 %v243
    %v640 = vunpack.c.h.b16 %v243
    %v641 = vunpack.c.l.b16 %v244
    %v642 = vunpack.c.h.b16 %v244
    %v643 = vunpack.c.l.b16 %v245
    %v644 = vunpack.c.h.b16 %v245
    %v645 = vunpack.c.l.b16 %v246
    %v646 = vunpack.c.h.b16 %v246
    %v647 = vunpack.c.l.b16 %v247
    %v648 = vunpack.c.h.b16 %v247
    %v649 = vunpack.c.l.b16 %v248
    %v650 = vunpack.c.h.b16 %v248
    %v651 = vunpack.c.l.b16 %v249
    %v652 = vunpack.c.h.b16 %v249
    %v653 = vunpack.c.l.b16 %v250
    %v654 = vunpack.c.h.b16 %v250
    %v655 = vunpack.c.l.b16 %v251
    %v656 = vunpack.c.h.b16 %v251
    %v657 = vunpack.c.l.b16 %v252
    %v658 = vunpack.c.h.b16 %v252
    %v659 = vunpack.c.l.b16 %v253
    %v660 = vunpack.c.h.b16 %v253
    %v661 = vunpack.c.l.b16 %v254
    %v662 = vunpack.c.h.b16 %v254
    %v663 = vunpack.c.l.b16 %v255
    %v664 = vunpack.c.h.b16 %v255
    %v665 = vunpack.c.l.b16 %v256
    %v666 = vunpack.c.h.b16 %v256
    %v667 = vunpack.c.l.b16 %v257
    %v668 = vunpack.c.h.b16 %v257
    %v669 = vunpack.c.l.b16 %v258
    %v670 = vunpack.c.h.b16 %v258
    %v671 = vunpack.c.l.b16 %v259
    %v672 = vunpack.c.h.b16 %v259
    %v673 = vunpack.c.l.b16 %v260
    %v674 = vunpack.c.h.b16 %v260
    %v675 = vunpack.c.l.b16 %v261
    %v676 = vunpack.c.h.b16 %v261
    %v677 = vunpack.c.l.b16 %v262
    %v678 = vunpack.c.h.b16 %v262
    %v679 = vunpack.c.l.b16 %v263
    %v680 = vunpack.c.h.b16 %v263
    %v681 = vunpack.c.l.b16 %v264
    %v682 = vunpack.c.h.b16 %v264
    %v683 = vunpack.c.l.b16 %v265
    %v684 = vunpack.c.h.b16 %v265
    %v685 = vunpack.c.l.b16 %v266
    %v686 = vunpack.c.h.b16 %v266
    %v687 = vunpack.c.l.b16 %v267
    %v688 = vunpack.c.h.b16 %v267
    %v689 = vunpack.c.l.b16 %v268
    %v690 = vunpack.c.h.b16 %v268
    %v691 = vunpack.c.l.b16 %v269
    %v692 = vunpack.c.h.b16 %v269
    %v693 = vunpack.c.l.b16 %v270
    %v694 = vunpack.c.h.b16 %v270
    %v695 = vunpack.c.l.b16 %v271
    %v696 = vunpack.c.h.b16 %v271
    %v697 = vunpack.c.l.b16 %v272
    %v698 = vunpack.c.h.b16 %v272
    %v699 = vunpack.c.l.b16 %v273
    %v700 = vunpack.c.h.b16 %v273
    %v701 = vunpack.c.l.b16 %v274
    %v702 = vunpack.c.h.b16 %v274
    %v703 = vunpack.c.l.b16 %v275
    %v704 = vunpack.c.h.b16 %v275
    %v705 = vunpack.c.l.b16 %v276
    %v706 = vunpack.c.h.b16 %v276
    %v707 = vunpack.c.l.b16 %v277
    %v708 = vunpack.c.h.b16 %v277
    %v709 = vunpack.c.l.b16 %v278
    %v710 = vunpack.c.h.b16 %v278
    %v711 = vunpack.c.l.b16 %v279
    %v712 = vunpack.c.h.b16 %v279
    %v713 = vunpack.c.l.b16 %v280
    %v714 = vunpack.c.h.b16 %v280
    %v715 = vunpack.c.l.b16 %v281
    %v716 = vunpack.c.h.b16 %v281
    %v717 = vunpack.c.l.b16 %v282
    %v718 = vunpack.c.h.b16 %v282
    %v719 = vunpack.c.l.b16 %v283
    %v720 = vunpack.c.h.b16 %v283
    %v721 = vunpack.c.l.b16 %v284
    %v722 = vunpack.c.h.b16 %v284
    %v723 = vunpack.c.l.b16 %v285
    %v724 = vunpack.c.h.b16 %v285
    %v725 = vunpack.c.l.b16 %v286
    %v726 = vunpack.c.h.b16 %v286
    %v727 = vunpack.c.l.b16 %v287
    %v728 = vunpack.c.h.b16 %v287
    %v729 = vunpack.c.l.b16 %v288
    %v730 = vunpack.c.h.b16 %v288
    %v731 = vunpack.c.l.b16 %v289
    %v732 = vunpack.c.h.b16 %v289
    %v733 = vunpack.c.l.b16 %v290
    %v734 = vunpack.c.h.b16 %v290
    %v735 = vunpack.c.l.b16 %v291
    %v736 = vunpack.c.h.b16 %v291
    %v737 = vunpack.c.l.b16 %v292
    %v738 = vunpack.c.h.b16 %v292
    %v739 = vunpack.c.l.b16 %v293
    %v740 = vunpack.c.h.b16 %v293
    %v741 = vunpack.c.l.b16 %v294
    %v742 = vunpack.c.h.b16 %v294
    %v743 = vpack.c.b16 %v491, %v487
    %v744 = vpack.c.b16 %v492, %v488
    %v745 = vpack.c.b16 %v493, %v489
    %v746 = vpack.c.b16 %v494, %v490
    %v747 = vpack.c.b16 %v499, %v495
    %v748 = vpack.c.b16 %v500, %v496
    %v749 = vpack.c.b16 %v501, %v497
    %v750 = vpack.c.b16 %v502, %v498
    %v751 = vpack.c.b16 %v507, %v503
    %v752 = vpack.c.b16 %v508, %v504
    %v753 = vpack.c.b16 %v509, %v505
    %v754 = vpack.c.b16 %v510, %v506
    %v755 = vpack.c.b16 %v515, %v511
    %v756 = vpack.c.b16 %v516, %v512
    %v757 = vpack.c.b16 %v517, %v513
    %v758 = vpack.c.b16 %v518, %v514
    %v759 = vpack.c.b16 %v523, %v519
    %v760 = vpack.c.b16 %v524, %v520
    %v761 = vpack.c.b16 %v525, %v521
    %v762 = vpack.c.b16 %v526, %v522
    %v763 = vpack.c.b16 %v531, %v527
    %v764 = vpack.c.b16 %v532, %v528
    %v765 = vpack.c.b16 %v533, %v529
    %v766 = vpack.c.b16 %v534, %v530
    %v767 = vpack.c.b16 %v539, %v535
    %v768 = vpack.c.b16 %v540, %v536
    %v769 = vpack.c.b16 %v541, %v537
    %v770 = vpack.c.b16 %v542, %v538
    %v771 = vpack.c.b16 %v547, %v543
    %v772 = vpack.c.b16 %v548, %v544
    %v773 = vpack.c.b16 %v549, %v545
    %v774 = vpack.c.b16 %v550, %v546
    %v775 = vpack.c.b16 %v555, %v551
    %v776 = vpack.c.b16 %v556, %v552
    %v777 = vpack.c.b16 %v557, %v553
    %v778 = vpack.c.b16 %v558, %v554
    %v779 = vpack.c.b16 %v563, %v559
    %v780 = vpack.c.b16 %v564, %v560
    %v781 = vpack.c.b16 %v565, %v561
    %v782 = vpack.c.b16 %v566, %v562
    %v783 = vpack.c.b16 %v571, %v567
    %v784 = vpack.c.b16 %v572, %v568
    %v785 = vpack.c.b16 %v573, %v569
    %v786 = vpack.c.b16 %v574, %v570
    %v787 = vpack.c.b16 %v579, %v575
    %v788 = vpack.c.b16 %v580, %v576
    %v789 = vpack.c.b16 %v581, %v577
    %v790 = vpack.c.b16 %v582, %v578
    %v791 = vpack.c.b16 %v587, %v583
    %v792 = vpack.c.b16 %v588, %v584
    %v793 = vpack.c.b16 %v589, %v585
    %v794 = vpack.c.b16 %v590, %v586
    %v795 = vpack.c.b16 %v595, %v591
    %v796 = vpack.c.b16 %v596, %v592
    %v797 = vpack.c.b16 %v597, %v593
    %v798 = vpack.c.b16 %v598, %v594
    %v799 = vpack.c.b16 %v603, %v599
    %v800 = vpack.c.b16 %v604, %v600
    %v801 = vpack.c.b16 %v605, %v601
    %v802 = vpack.c.b16 %v606, %v602
    %v803 = vpack.c.b16 %v611, %v607
    %v804 = vpack.c.b16 %v612, %v608
    %v805 = vpack.c.b16 %v613, %v609
    %v806 = vpack.c.b16 %v614, %v610
    %v807 = vpack.c.b16 %v619, %v615
    %v808 = vpack.c.b16 %v620, %v616
    %v809 = vpack.c.b16 %v621, %v617
    %v810 = vpack.c.b16 %v622, %v618
    %v811 = vpack.c.b16 %v627, %v623
    %v812 = vpack.c.b16 %v628, %v624
    %v813 = vpack.c.b16 %v629, %v625
    %v814 = vpack.c.b16 %v630, %v626
    %v815 = vpack.c.b16 %v635, %v631
    %v816 = vpack.c.b16 %v636, %v632
    %v817 = vpack.c.b16 %v637, %v633
    %v818 = vpack.c.b16 %v638, %v634
    %v819 = vpack.c.b16 %v643, %v639
    %v820 = vpack.c.b16 %v644, %v640
    %v821 = vpack.c.b16 %v645, %v641
    %v822 = vpack.c.b16 %v646, %v642
    %v823 = vpack.c.b16 %v651, %v647
    %v824 = vpack.c.b16 %v652, %v648
    %v825 = vpack.c.b16 %v653, %v649
    %v826 = vpack.c.b16 %v654, %v650
    %v827 = vpack.c.b16 %v659, %v655
    %v828 = vpack.c.b16 %v660, %v656
    %v829 = vpack.c.b16 %v661, %v657
    %v830 = vpack.c.b16 %v662, %v658
    %v831 = vpack.c.b16 %v667, %v663
    %v832 = vpack.c.b16 %v668, %v664
    %v833 = vpack.c.b16 %v669, %v665
    %v834 = vpack.c.b16 %v670, %v666
    %v835 = vpack.c.b16 %v675, %v671
    %v836 = vpack.c.b16 %v676, %v672
    %v837 = vpack.c.b16 %v677, %v673
    %v838 = vpack.c.b16 %v678, %v674
    %v839 = vpack.c.b16 %v683, %v679
    %v840 = vpack.c.b16 %v684, %v680
    %v841 = vpack.c.b16 %v685, %v681
    %v842 = vpack.c.b16 %v686, %v682
    %v843 = vpack.c.b16 %v691, %v687
    %v844 = vpack.c.b16 %v692, %v688
    %v845 = vpack.c.b16 %v693, %v689
    %v846 = vpack.c.b16 %v694, %v690
    %v847 = vpack.c.b16 %v699, %v695
    %v848 = vpack.c.b16 %v700, %v696
    %v849 = vpack.c.b16 %v701, %v697
    %v850 = vpack.c.b16 %v702, %v698
    %v851 = vpack.c.b16 %v707, %v703
    %v852 = vpack.c.b16 %v708, %v704
    %v853 = vpack.c.b16 %v709, %v705
    %v854 = vpack.c.b16 %v710, %v706
    %v855 = vpack.c.b16 %v715, %v711
    %v856 = vpack.c.b16 %v716, %v712
    %v857 = vpack.c.b16 %v717, %v713
    %v858 = vpack.c.b16 %v718, %v714
    %v859 = vpack.c.b16 %v723, %v719
    %v860 = vpack.c.b16 %v724, %v720
    %v861 = vpack.c.b16 %v725, %v721
    %v862 = vpack.c.b16 %v726, %v722
    %v863 = vpack.c.b16 %v731, %v727
    %v864 = vpack.c.b16 %v732, %v728
    %v865 = vpack.c.b16 %v733, %v729
    %v866 = vpack.c.b16 %v734, %v730
    %v867 = vpack.c.b16 %v739, %v735
    %v868 = vpack.c.b16 %v740, %v736
    %v869 = vpack.c.b16 %v741, %v737
    %v870 = vpack.c.b16 %v742, %v738
    %v1063 = vunpack.c.l.b16 %v295
    %v1064 = vunpack.c.l.b16 %v296
    %v1065 = vunpack.c.l.b16 %v297
    %v1066 = vunpack.c.l.b16 %v298
    %v1067 = vunpack.c.l.b16 %v299
    %v1068 = vunpack.c.l.b16 %v300
    %v1069 = vunpack.c.l.b16 %v301
    %v1070 = vunpack.c.l.b16 %v302
    %v1071 = vunpack.c.l.b16 %v303
    %v1072 = vunpack.c.l.b16 %v304
    %v1073 = vunpack.c.l.b16 %v305
    %v1074 = vunpack.c.l.b16 %v306
    %v1075 = vunpack.c.l.b16 %v307
    %v1076 = vunpack.c.l.b16 %v308
    %v1077 = vunpack.c.l.b16 %v309
    %v1078 = vunpack.c.l.b16 %v310
    %v1079 = vunpack.c.l.b16 %v311
    %v1080 = vunpack.c.l.b16 %v312
    %v1081 = vunpack.c.l.b16 %v313
    %v1082 = vunpack.c.l.b16 %v314
    %v1083 = vunpack.c.l.b16 %v315
    %v1084 = vunpack.c.l.b16 %v316
    %v1085 = vunpack.c.l.b16 %v317
    %v1086 = vunpack.c.l.b16 %v318
    %v1087 = vunpack.c.l.b16 %v319
    %v1088 = vunpack.c.l.b16 %v320
    %v1089 = vunpack.c.l.b16 %v321
    %v1090 = vunpack.c.l.b16 %v322
    %v1091 = vunpack.c.l.b16 %v323
    %v1092 = vunpack.c.l.b16 %v324
    %v1093 = vunpack.c.l.b16 %v325
    %v1094 = vunpack.c.l.b16 %v326
    %v1095 = vunpack.c.l.b16 %v327
    %v1096 = vunpack.c.l.b16 %v328
    %v1097 = vunpack.c.l.b16 %v329
    %v1098 = vunpack.c.l.b16 %v330
    %v1099 = vunpack.c.l.b16 %v331
    %v1100 = vunpack.c.l.b16 %v332
    %v1101 = vunpack.c.l.b16 %v333
    %v1102 = vunpack.c.l.b16 %v334
    %v1103 = vunpack.c.l.b16 %v335
    %v1104 = vunpack.c.l.b16 %v336
    %v1105 = vunpack.c.l.b16 %v337
    %v1106 = vunpack.c.l.b16 %v338
    %v1107 = vunpack.c.l.b16 %v339
    %v1108 = vunpack.c.l.b16 %v340
    %v1109 = vunpack.c.l.b16 %v341
    %v1110 = vunpack.c.l.b16 %v342
    %v1111 = vunpack.c.l.b16 %v343
    %v1112 = vunpack.c.l.b16 %v344
    %v1113 = vunpack.c.l.b16 %v345
    %v1114 = vunpack.c.l.b16 %v346
    %v1115 = vunpack.c.l.b16 %v347
    %v1116 = vunpack.c.l.b16 %v348
    %v1117 = vunpack.c.l.b16 %v349
    %v1118 = vunpack.c.l.b16 %v350
    %v1119 = vunpack.c.l.b16 %v351
    %v1120 = vunpack.c.l.b16 %v352
    %v1121 = vunpack.c.l.b16 %v353
    %v1122 = vunpack.c.l.b16 %v354
    %v1123 = vunpack.c.l.b16 %v355
    %v1124 = vunpack.c.l.b16 %v356
    %v1125 = vunpack.c.l.b16 %v357
    %v1126 = vunpack.c.l.b16 %v358
    %v1127 = vpack.c.b16 %v1064, %v1063
    %v1128 = vpack.c.b16 %v1066, %v1065
    %v1129 = vpack.c.b16 %v1068, %v1067
    %v1130 = vpack.c.b16 %v1070, %v1069
    %v1131 = vpack.c.b16 %v1072, %v1071
    %v1132 = vpack.c.b16 %v1074, %v1073
    %v1133 = vpack.c.b16 %v1076, %v1075
    %v1134 = vpack.c.b16 %v1078, %v1077
    %v1135 = vpack.c.b16 %v1080, %v1079
    %v1136 = vpack.c.b16 %v1082, %v1081
    %v1137 = vpack.c.b16 %v1084, %v1083
    %v1138 = vpack.c.b16 %v1086, %v1085
    %v1139 = vpack.c.b16 %v1088, %v1087
    %v1140 = vpack.c.b16 %v1090, %v1089
    %v1141 = vpack.c.b16 %v1092, %v1091
    %v1142 = vpack.c.b16 %v1094, %v1093
    %v1143 = vpack.c.b16 %v1096, %v1095
    %v1144 = vpack.c.b16 %v1098, %v1097
    %v1145 = vpack.c.b16 %v1100, %v1099
    %v1146 = vpack.c.b16 %v1102, %v1101
    %v1147 = vpack.c.b16 %v1104, %v1103
    %v1148 = vpack.c.b16 %v1106, %v1105
    %v1149 = vpack.c.b16 %v1108, %v1107
    %v1150 = vpack.c.b16 %v1110, %v1109
    %v1151 = vpack.c.b16 %v1112, %v1111
    %v1152 = vpack.c.b16 %v1114, %v1113
    %v1153 = vpack.c.b16 %v1116, %v1115
    %v1154 = vpack.c.b16 %v1118, %v1117
    %v1155 = vpack.c.b16 %v1120, %v1119
    %v1156 = vpack.c.b16 %v1122, %v1121
    %v1157 = vpack.c.b16 %v1124, %v1123
    %v1158 = vpack.c.b16 %v1126, %v1125
    %1191 = vmatpush.bf16.msra.mxu0 %v1134
    %1192 = vmatpush.bf16.msra.mxu0 %v1133
    %1193 = vmatpush.bf16.msra.mxu0 %v1132
    %1194 = vmatpush.bf16.msra.mxu0 %v1131
    %1195 = vmatpush.bf16.msra.mxu0 %v1130
    %1196 = vmatpush.bf16.msra.mxu0 %v1129
    %1197 = vmatpush.bf16.msra.mxu0 %v1128
    %1198 = vmatpush.bf16.msra.mxu0 %v1127
    %1199 = vmatmul.bf16.gmra.mxu0 %v743
    %v1200 = vpop.f32.mrf.mxu0
    %v1201 = vadd.f32 0.0, %v1200
    %v1202 = vpop.f32.mrf.mxu0
    %v1203 = vadd.f32 0.0, %v1202
    %1204 = vmatmul.bf16.gmra.mxu0 %v747
    %v1205 = vpop.f32.mrf.mxu0
    %v1206 = vadd.f32 0.0, %v1205
    %v1207 = vpop.f32.mrf.mxu0
    %v1208 = vadd.f32 0.0, %v1207
    %1209 = vmatmul.bf16.gmra.mxu0 %v751
    %v1210 = vpop.f32.mrf.mxu0
    %v1211 = vadd.f32 0.0, %v1210
    %v1212 = vpop.f32.mrf.mxu0
    %v1213 = vadd.f32 0.0, %v1212
    %1214 = vmatmul.bf16.gmra.mxu0 %v755
    %v1215 = vpop.f32.mrf.mxu0
    %v1216 = vadd.f32 0.0, %v1215
    %v1217 = vpop.f32.mrf.mxu0
    %v1218 = vadd.f32 0.0, %v1217
    %1219 = vmatmul.bf16.gmra.mxu0 %v759
    %v1220 = vpop.f32.mrf.mxu0
    %v1221 = vadd.f32 0.0, %v1220
    %v1222 = vpop.f32.mrf.mxu0
    %v1223 = vadd.f32 0.0, %v1222
    %1224 = vmatmul.bf16.gmra.mxu0 %v763
    %v1225 = vpop.f32.mrf.mxu0
    %v1226 = vadd.f32 0.0, %v1225
    %v1227 = vpop.f32.mrf.mxu0
    %v1228 = vadd.f32 0.0, %v1227
    %1229 = vmatmul.bf16.gmra.mxu0 %v767
    %v1230 = vpop.f32.mrf.mxu0
    %v1231 = vadd.f32 0.0, %v1230
    %v1232 = vpop.f32.mrf.mxu0
    %v1233 = vadd.f32 0.0, %v1232
    %1234 = vmatmul.bf16.gmra.mxu0 %v771
    %v1235 = vpop.f32.mrf.mxu0
    %v1236 = vadd.f32 0.0, %v1235
    %v1237 = vpop.f32.mrf.mxu0
    %v1238 = vadd.f32 0.0, %v1237
    %1239 = vmatmul.bf16.gmra.mxu0 %v775
    %v1240 = vpop.f32.mrf.mxu0
    %v1241 = vadd.f32 0.0, %v1240
    %v1242 = vpop.f32.mrf.mxu0
    %v1243 = vadd.f32 0.0, %v1242
    %1244 = vmatmul.bf16.gmra.mxu0 %v779
    %v1245 = vpop.f32.mrf.mxu0
    %v1246 = vadd.f32 0.0, %v1245
    %v1247 = vpop.f32.mrf.mxu0
    %v1248 = vadd.f32 0.0, %v1247
    %1249 = vmatmul.bf16.gmra.mxu0 %v783
    %v1250 = vpop.f32.mrf.mxu0
    %v1251 = vadd.f32 0.0, %v1250
    %v1252 = vpop.f32.mrf.mxu0
    %v1253 = vadd.f32 0.0, %v1252
    %1254 = vmatmul.bf16.gmra.mxu0 %v787
    %v1255 = vpop.f32.mrf.mxu0
    %v1256 = vadd.f32 0.0, %v1255
    %v1257 = vpop.f32.mrf.mxu0
    %v1258 = vadd.f32 0.0, %v1257
    %1259 = vmatmul.bf16.gmra.mxu0 %v791
    %v1260 = vpop.f32.mrf.mxu0
    %v1261 = vadd.f32 0.0, %v1260
    %v1262 = vpop.f32.mrf.mxu0
    %v1263 = vadd.f32 0.0, %v1262
    %1264 = vmatmul.bf16.gmra.mxu0 %v795
    %v1265 = vpop.f32.mrf.mxu0
    %v1266 = vadd.f32 0.0, %v1265
    %v1267 = vpop.f32.mrf.mxu0
    %v1268 = vadd.f32 0.0, %v1267
    %1269 = vmatmul.bf16.gmra.mxu0 %v799
    %v1270 = vpop.f32.mrf.mxu0
    %v1271 = vadd.f32 0.0, %v1270
    %v1272 = vpop.f32.mrf.mxu0
    %v1273 = vadd.f32 0.0, %v1272
    %1274 = vmatmul.bf16.gmra.mxu0 %v803
    %v1275 = vpop.f32.mrf.mxu0
    %v1276 = vadd.f32 0.0, %v1275
    %v1277 = vpop.f32.mrf.mxu0
    %v1278 = vadd.f32 0.0, %v1277
    %1279 = vmatmul.bf16.gmra.mxu0 %v807
    %v1280 = vpop.f32.mrf.mxu0
    %v1281 = vadd.f32 0.0, %v1280
    %v1282 = vpop.f32.mrf.mxu0
    %v1283 = vadd.f32 0.0, %v1282
    %1284 = vmatmul.bf16.gmra.mxu0 %v811
    %v1285 = vpop.f32.mrf.mxu0
    %v1286 = vadd.f32 0.0, %v1285
    %v1287 = vpop.f32.mrf.mxu0
    %v1288 = vadd.f32 0.0, %v1287
    %1289 = vmatmul.bf16.gmra.mxu0 %v815
    %v1290 = vpop.f32.mrf.mxu0
    %v1291 = vadd.f32 0.0, %v1290
    %v1292 = vpop.f32.mrf.mxu0
    %v1293 = vadd.f32 0.0, %v1292
    %1294 = vmatmul.bf16.gmra.mxu0 %v819
    %v1295 = vpop.f32.mrf.mxu0
    %v1296 = vadd.f32 0.0, %v1295
    %v1297 = vpop.f32.mrf.mxu0
    %v1298 = vadd.f32 0.0, %v1297
    %1299 = vmatmul.bf16.gmra.mxu0 %v823
    %v1300 = vpop.f32.mrf.mxu0
    %v1301 = vadd.f32 0.0, %v1300
    %v1302 = vpop.f32.mrf.mxu0
    %v1303 = vadd.f32 0.0, %v1302
    %1304 = vmatmul.bf16.gmra.mxu0 %v827
    %v1305 = vpop.f32.mrf.mxu0
    %v1306 = vadd.f32 0.0, %v1305
    %v1307 = vpop.f32.mrf.mxu0
    %v1308 = vadd.f32 0.0, %v1307
    %1309 = vmatmul.bf16.gmra.mxu0 %v831
    %v1310 = vpop.f32.mrf.mxu0
    %v1311 = vadd.f32 0.0, %v1310
    %v1312 = vpop.f32.mrf.mxu0
    %v1313 = vadd.f32 0.0, %v1312
    %1314 = vmatmul.bf16.gmra.mxu0 %v835
    %v1315 = vpop.f32.mrf.mxu0
    %v1316 = vadd.f32 0.0, %v1315
    %v1317 = vpop.f32.mrf.mxu0
    %v1318 = vadd.f32 0.0, %v1317
    %1319 = vmatmul.bf16.gmra.mxu0 %v839
    %v1320 = vpop.f32.mrf.mxu0
    %v1321 = vadd.f32 0.0, %v1320
    %v1322 = vpop.f32.mrf.mxu0
    %v1323 = vadd.f32 0.0, %v1322
    %1324 = vmatmul.bf16.gmra.mxu0 %v843
    %v1325 = vpop.f32.mrf.mxu0
    %v1326 = vadd.f32 0.0, %v1325
    %v1327 = vpop.f32.mrf.mxu0
    %v1328 = vadd.f32 0.0, %v1327
    %1329 = vmatmul.bf16.gmra.mxu0 %v847
    %v1330 = vpop.f32.mrf.mxu0
    %v1331 = vadd.f32 0.0, %v1330
    %v1332 = vpop.f32.mrf.mxu0
    %v1333 = vadd.f32 0.0, %v1332
    %1334 = vmatmul.bf16.gmra.mxu0 %v851
    %v1335 = vpop.f32.mrf.mxu0
    %v1336 = vadd.f32 0.0, %v1335
    %v1337 = vpop.f32.mrf.mxu0
    %v1338 = vadd.f32 0.0, %v1337
    %1339 = vmatmul.bf16.gmra.mxu0 %v855
    %v1340 = vpop.f32.mrf.mxu0
    %v1341 = vadd.f32 0.0, %v1340
    %v1342 = vpop.f32.mrf.mxu0
    %v1343 = vadd.f32 0.0, %v1342
    %1344 = vmatmul.bf16.gmra.mxu0 %v859
    %v1345 = vpop.f32.mrf.mxu0
    %v1346 = vadd.f32 0.0, %v1345
    %v1347 = vpop.f32.mrf.mxu0
    %v1348 = vadd.f32 0.0, %v1347
    %1349 = vmatmul.bf16.gmra.mxu0 %v863
    %v1350 = vpop.f32.mrf.mxu0
    %v1351 = vadd.f32 0.0, %v1350
    %v1352 = vpop.f32.mrf.mxu0
    %v1353 = vadd.f32 0.0, %v1352
    %1354 = vmatmul.bf16.gmra.mxu0 %v867
    %v1355 = vpop.f32.mrf.mxu0
    %v1356 = vadd.f32 0.0, %v1355
    %v1357 = vpop.f32.mrf.mxu0
    %v1358 = vadd.f32 0.0, %v1357
    %1359 = vdwg.mxu0
    %1360 = vmatpush.bf16.msra.mxu0 %v1142
    %1361 = vmatpush.bf16.msra.mxu0 %v1141
    %1362 = vmatpush.bf16.msra.mxu0 %v1140
    %1363 = vmatpush.bf16.msra.mxu0 %v1139
    %1364 = vmatpush.bf16.msra.mxu0 %v1138
    %1365 = vmatpush.bf16.msra.mxu0 %v1137
    %1366 = vmatpush.bf16.msra.mxu0 %v1136
    %1367 = vmatpush.bf16.msra.mxu0 %v1135
    %1368 = vmatmul.bf16.gmra.mxu0 %v744
    %v1369 = vpop.f32.mrf.mxu0
    %v1370 = vadd.f32 %v1201, %v1369
    %v1371 = vpop.f32.mrf.mxu0
    %v1372 = vadd.f32 %v1203, %v1371
    %1373 = vmatmul.bf16.gmra.mxu0 %v748
    %v1374 = vpop.f32.mrf.mxu0
    %v1375 = vadd.f32 %v1206, %v1374
    %v1376 = vpop.f32.mrf.mxu0
    %v1377 = vadd.f32 %v1208, %v1376
    %1378 = vmatmul.bf16.gmra.mxu0 %v752
    %v1379 = vpop.f32.mrf.mxu0
    %v1380 = vadd.f32 %v1211, %v1379
    %v1381 = vpop.f32.mrf.mxu0
    %v1382 = vadd.f32 %v1213, %v1381
    %1383 = vmatmul.bf16.gmra.mxu0 %v756
    %v1384 = vpop.f32.mrf.mxu0
    %v1385 = vadd.f32 %v1216, %v1384
    %v1386 = vpop.f32.mrf.mxu0
    %v1387 = vadd.f32 %v1218, %v1386
    %1388 = vmatmul.bf16.gmra.mxu0 %v760
    %v1389 = vpop.f32.mrf.mxu0
    %v1390 = vadd.f32 %v1221, %v1389
    %v1391 = vpop.f32.mrf.mxu0
    %v1392 = vadd.f32 %v1223, %v1391
    %1393 = vmatmul.bf16.gmra.mxu0 %v764
    %v1394 = vpop.f32.mrf.mxu0
    %v1395 = vadd.f32 %v1226, %v1394
    %v1396 = vpop.f32.mrf.mxu0
    %v1397 = vadd.f32 %v1228, %v1396
    %1398 = vmatmul.bf16.gmra.mxu0 %v768
    %v1399 = vpop.f32.mrf.mxu0
    %v1400 = vadd.f32 %v1231, %v1399
    %v1401 = vpop.f32.mrf.mxu0
    %v1402 = vadd.f32 %v1233, %v1401
    %1403 = vmatmul.bf16.gmra.mxu0 %v772
    %v1404 = vpop.f32.mrf.mxu0
    %v1405 = vadd.f32 %v1236, %v1404
    %v1406 = vpop.f32.mrf.mxu0
    %v1407 = vadd.f32 %v1238, %v1406
    %1408 = vmatmul.bf16.gmra.mxu0 %v776
    %v1409 = vpop.f32.mrf.mxu0
    %v1410 = vadd.f32 %v1241, %v1409
    %v1411 = vpop.f32.mrf.mxu0
    %v1412 = vadd.f32 %v1243, %v1411
    %1413 = vmatmul.bf16.gmra.mxu0 %v780
    %v1414 = vpop.f32.mrf.mxu0
    %v1415 = vadd.f32 %v1246, %v1414
    %v1416 = vpop.f32.mrf.mxu0
    %v1417 = vadd.f32 %v1248, %v1416
    %1418 = vmatmul.bf16.gmra.mxu0 %v784
    %v1419 = vpop.f32.mrf.mxu0
    %v1420 = vadd.f32 %v1251, %v1419
    %v1421 = vpop.f32.mrf.mxu0
    %v1422 = vadd.f32 %v1253, %v1421
    %1423 = vmatmul.bf16.gmra.mxu0 %v788
    %v1424 = vpop.f32.mrf.mxu0
    %v1425 = vadd.f32 %v1256, %v1424
    %v1426 = vpop.f32.mrf.mxu0
    %v1427 = vadd.f32 %v1258, %v1426
    %1428 = vmatmul.bf16.gmra.mxu0 %v792
    %v1429 = vpop.f32.mrf.mxu0
    %v1430 = vadd.f32 %v1261, %v1429
    %v1431 = vpop.f32.mrf.mxu0
    %v1432 = vadd.f32 %v1263, %v1431
    %1433 = vmatmul.bf16.gmra.mxu0 %v796
    %v1434 = vpop.f32.mrf.mxu0
    %v1435 = vadd.f32 %v1266, %v1434
    %v1436 = vpop.f32.mrf.mxu0
    %v1437 = vadd.f32 %v1268, %v1436
    %1438 = vmatmul.bf16.gmra.mxu0 %v800
    %v1439 = vpop.f32.mrf.mxu0
    %v1440 = vadd.f32 %v1271, %v1439
    %v1441 = vpop.f32.mrf.mxu0
    %v1442 = vadd.f32 %v1273, %v1441
    %1443 = vmatmul.bf16.gmra.mxu0 %v804
    %v1444 = vpop.f32.mrf.mxu0
    %v1445 = vadd.f32 %v1276, %v1444
    %v1446 = vpop.f32.mrf.mxu0
    %v1447 = vadd.f32 %v1278, %v1446
    %1448 = vmatmul.bf16.gmra.mxu0 %v808
    %v1449 = vpop.f32.mrf.mxu0
    %v1450 = vadd.f32 %v1281, %v1449
    %v1451 = vpop.f32.mrf.mxu0
    %v1452 = vadd.f32 %v1283, %v1451
    %1453 = vmatmul.bf16.gmra.mxu0 %v812
    %v1454 = vpop.f32.mrf.mxu0
    %v1455 = vadd.f32 %v1286, %v1454
    %v1456 = vpop.f32.mrf.mxu0
    %v1457 = vadd.f32 %v1288, %v1456
    %1458 = vmatmul.bf16.gmra.mxu0 %v816
    %v1459 = vpop.f32.mrf.mxu0
    %v1460 = vadd.f32 %v1291, %v1459
    %v1461 = vpop.f32.mrf.mxu0
    %v1462 = vadd.f32 %v1293, %v1461
    %1463 = vmatmul.bf16.gmra.mxu0 %v820
    %v1464 = vpop.f32.mrf.mxu0
    %v1465 = vadd.f32 %v1296, %v1464
    %v1466 = vpop.f32.mrf.mxu0
    %v1467 = vadd.f32 %v1298, %v1466
    %1468 = vmatmul.bf16.gmra.mxu0 %v824
    %v1469 = vpop.f32.mrf.mxu0
    %v1470 = vadd.f32 %v1301, %v1469
    %v1471 = vpop.f32.mrf.mxu0
    %v1472 = vadd.f32 %v1303, %v1471
    %1473 = vmatmul.bf16.gmra.mxu0 %v828
    %v1474 = vpop.f32.mrf.mxu0
    %v1475 = vadd.f32 %v1306, %v1474
    %v1476 = vpop.f32.mrf.mxu0
    %v1477 = vadd.f32 %v1308, %v1476
    %1478 = vmatmul.bf16.gmra.mxu0 %v832
    %v1479 = vpop.f32.mrf.mxu0
    %v1480 = vadd.f32 %v1311, %v1479
    %v1481 = vpop.f32.mrf.mxu0
    %v1482 = vadd.f32 %v1313, %v1481
    %1483 = vmatmul.bf16.gmra.mxu0 %v836
    %v1484 = vpop.f32.mrf.mxu0
    %v1485 = vadd.f32 %v1316, %v1484
    %v1486 = vpop.f32.mrf.mxu0
    %v1487 = vadd.f32 %v1318, %v1486
    %1488 = vmatmul.bf16.gmra.mxu0 %v840
    %v1489 = vpop.f32.mrf.mxu0
    %v1490 = vadd.f32 %v1321, %v1489
    %v1491 = vpop.f32.mrf.mxu0
    %v1492 = vadd.f32 %v1323, %v1491
    %1493 = vmatmul.bf16.gmra.mxu0 %v844
    %v1494 = vpop.f32.mrf.mxu0
    %v1495 = vadd.f32 %v1326, %v1494
    %v1496 = vpop.f32.mrf.mxu0
    %v1497 = vadd.f32 %v1328, %v1496
    %1498 = vmatmul.bf16.gmra.mxu0 %v848
    %v1499 = vpop.f32.mrf.mxu0
    %v1500 = vadd.f32 %v1331, %v1499
    %v1501 = vpop.f32.mrf.mxu0
    %v1502 = vadd.f32 %v1333, %v1501
    %1503 = vmatmul.bf16.gmra.mxu0 %v852
    %v1504 = vpop.f32.mrf.mxu0
    %v1505 = vadd.f32 %v1336, %v1504
    %v1506 = vpop.f32.mrf.mxu0
    %v1507 = vadd.f32 %v1338, %v1506
    %1508 = vmatmul.bf16.gmra.mxu0 %v856
    %v1509 = vpop.f32.mrf.mxu0
    %v1510 = vadd.f32 %v1341, %v1509
    %v1511 = vpop.f32.mrf.mxu0
    %v1512 = vadd.f32 %v1343, %v1511
    %1513 = vmatmul.bf16.gmra.mxu0 %v860
    %v1514 = vpop.f32.mrf.mxu0
    %v1515 = vadd.f32 %v1346, %v1514
    %v1516 = vpop.f32.mrf.mxu0
    %v1517 = vadd.f32 %v1348, %v1516
    %1518 = vmatmul.bf16.gmra.mxu0 %v864
    %v1519 = vpop.f32.mrf.mxu0
    %v1520 = vadd.f32 %v1351, %v1519
    %v1521 = vpop.f32.mrf.mxu0
    %v1522 = vadd.f32 %v1353, %v1521
    %1523 = vmatmul.bf16.gmra.mxu0 %v868
    %v1524 = vpop.f32.mrf.mxu0
    %v1525 = vadd.f32 %v1356, %v1524
    %v1526 = vpop.f32.mrf.mxu0
    %v1527 = vadd.f32 %v1358, %v1526
    %1528 = vdwg.mxu0
    %1529 = vmatpush.bf16.msra.mxu0 %v1150
    %1530 = vmatpush.bf16.msra.mxu0 %v1149
    %1531 = vmatpush.bf16.msra.mxu0 %v1148
    %1532 = vmatpush.bf16.msra.mxu0 %v1147
    %1533 = vmatpush.bf16.msra.mxu0 %v1146
    %1534 = vmatpush.bf16.msra.mxu0 %v1145
    %1535 = vmatpush.bf16.msra.mxu0 %v1144
    %1536 = vmatpush.bf16.msra.mxu0 %v1143
    %1537 = vmatmul.bf16.gmra.mxu0 %v745
    %v1538 = vpop.f32.mrf.mxu0
    %v1539 = vadd.f32 %v1370, %v1538
    %v1540 = vpop.f32.mrf.mxu0
    %v1541 = vadd.f32 %v1372, %v1540
    %1542 = vmatmul.bf16.gmra.mxu0 %v749
    %v1543 = vpop.f32.mrf.mxu0
    %v1544 = vadd.f32 %v1375, %v1543
    %v1545 = vpop.f32.mrf.mxu0
    %v1546 = vadd.f32 %v1377, %v1545
    %1547 = vmatmul.bf16.gmra.mxu0 %v753
    %v1548 = vpop.f32.mrf.mxu0
    %v1549 = vadd.f32 %v1380, %v1548
    %v1550 = vpop.f32.mrf.mxu0
    %v1551 = vadd.f32 %v1382, %v1550
    %1552 = vmatmul.bf16.gmra.mxu0 %v757
    %v1553 = vpop.f32.mrf.mxu0
    %v1554 = vadd.f32 %v1385, %v1553
    %v1555 = vpop.f32.mrf.mxu0
    %v1556 = vadd.f32 %v1387, %v1555
    %1557 = vmatmul.bf16.gmra.mxu0 %v761
    %v1558 = vpop.f32.mrf.mxu0
    %v1559 = vadd.f32 %v1390, %v1558
    %v1560 = vpop.f32.mrf.mxu0
    %v1561 = vadd.f32 %v1392, %v1560
    %1562 = vmatmul.bf16.gmra.mxu0 %v765
    %v1563 = vpop.f32.mrf.mxu0
    %v1564 = vadd.f32 %v1395, %v1563
    %v1565 = vpop.f32.mrf.mxu0
    %v1566 = vadd.f32 %v1397, %v1565
    %1567 = vmatmul.bf16.gmra.mxu0 %v769
    %v1568 = vpop.f32.mrf.mxu0
    %v1569 = vadd.f32 %v1400, %v1568
    %v1570 = vpop.f32.mrf.mxu0
    %v1571 = vadd.f32 %v1402, %v1570
    %1572 = vmatmul.bf16.gmra.mxu0 %v773
    %v1573 = vpop.f32.mrf.mxu0
    %v1574 = vadd.f32 %v1405, %v1573
    %v1575 = vpop.f32.mrf.mxu0
    %v1576 = vadd.f32 %v1407, %v1575
    %1577 = vmatmul.bf16.gmra.mxu0 %v777
    %v1578 = vpop.f32.mrf.mxu0
    %v1579 = vadd.f32 %v1410, %v1578
    %v1580 = vpop.f32.mrf.mxu0
    %v1581 = vadd.f32 %v1412, %v1580
    %1582 = vmatmul.bf16.gmra.mxu0 %v781
    %v1583 = vpop.f32.mrf.mxu0
    %v1584 = vadd.f32 %v1415, %v1583
    %v1585 = vpop.f32.mrf.mxu0
    %v1586 = vadd.f32 %v1417, %v1585
    %1587 = vmatmul.bf16.gmra.mxu0 %v785
    %v1588 = vpop.f32.mrf.mxu0
    %v1589 = vadd.f32 %v1420, %v1588
    %v1590 = vpop.f32.mrf.mxu0
    %v1591 = vadd.f32 %v1422, %v1590
    %1592 = vmatmul.bf16.gmra.mxu0 %v789
    %v1593 = vpop.f32.mrf.mxu0
    %v1594 = vadd.f32 %v1425, %v1593
    %v1595 = vpop.f32.mrf.mxu0
    %v1596 = vadd.f32 %v1427, %v1595
    %1597 = vmatmul.bf16.gmra.mxu0 %v793
    %v1598 = vpop.f32.mrf.mxu0
    %v1599 = vadd.f32 %v1430, %v1598
    %v1600 = vpop.f32.mrf.mxu0
    %v1601 = vadd.f32 %v1432, %v1600
    %1602 = vmatmul.bf16.gmra.mxu0 %v797
    %v1603 = vpop.f32.mrf.mxu0
    %v1604 = vadd.f32 %v1435, %v1603
    %v1605 = vpop.f32.mrf.mxu0
    %v1606 = vadd.f32 %v1437, %v1605
    %1607 = vmatmul.bf16.gmra.mxu0 %v801
    %v1608 = vpop.f32.mrf.mxu0
    %v1609 = vadd.f32 %v1440, %v1608
    %v1610 = vpop.f32.mrf.mxu0
    %v1611 = vadd.f32 %v1442, %v1610
    %1612 = vmatmul.bf16.gmra.mxu0 %v805
    %v1613 = vpop.f32.mrf.mxu0
    %v1614 = vadd.f32 %v1445, %v1613
    %v1615 = vpop.f32.mrf.mxu0
    %v1616 = vadd.f32 %v1447, %v1615
    %1617 = vmatmul.bf16.gmra.mxu0 %v809
    %v1618 = vpop.f32.mrf.mxu0
    %v1619 = vadd.f32 %v1450, %v1618
    %v1620 = vpop.f32.mrf.mxu0
    %v1621 = vadd.f32 %v1452, %v1620
    %1622 = vmatmul.bf16.gmra.mxu0 %v813
    %v1623 = vpop.f32.mrf.mxu0
    %v1624 = vadd.f32 %v1455, %v1623
    %v1625 = vpop.f32.mrf.mxu0
    %v1626 = vadd.f32 %v1457, %v1625
    %1627 = vmatmul.bf16.gmra.mxu0 %v817
    %v1628 = vpop.f32.mrf.mxu0
    %v1629 = vadd.f32 %v1460, %v1628
    %v1630 = vpop.f32.mrf.mxu0
    %v1631 = vadd.f32 %v1462, %v1630
    %1632 = vmatmul.bf16.gmra.mxu0 %v821
    %v1633 = vpop.f32.mrf.mxu0
    %v1634 = vadd.f32 %v1465, %v1633
    %v1635 = vpop.f32.mrf.mxu0
    %v1636 = vadd.f32 %v1467, %v1635
    %1637 = vmatmul.bf16.gmra.mxu0 %v825
    %v1638 = vpop.f32.mrf.mxu0
    %v1639 = vadd.f32 %v1470, %v1638
    %v1640 = vpop.f32.mrf.mxu0
    %v1641 = vadd.f32 %v1472, %v1640
    %1642 = vmatmul.bf16.gmra.mxu0 %v829
    %v1643 = vpop.f32.mrf.mxu0
    %v1644 = vadd.f32 %v1475, %v1643
    %v1645 = vpop.f32.mrf.mxu0
    %v1646 = vadd.f32 %v1477, %v1645
    %1647 = vmatmul.bf16.gmra.mxu0 %v833
    %v1648 = vpop.f32.mrf.mxu0
    %v1649 = vadd.f32 %v1480, %v1648
    %v1650 = vpop.f32.mrf.mxu0
    %v1651 = vadd.f32 %v1482, %v1650
    %1652 = vmatmul.bf16.gmra.mxu0 %v837
    %v1653 = vpop.f32.mrf.mxu0
    %v1654 = vadd.f32 %v1485, %v1653
    %v1655 = vpop.f32.mrf.mxu0
    %v1656 = vadd.f32 %v1487, %v1655
    %1657 = vmatmul.bf16.gmra.mxu0 %v841
    %v1658 = vpop.f32.mrf.mxu0
    %v1659 = vadd.f32 %v1490, %v1658
    %v1660 = vpop.f32.mrf.mxu0
    %v1661 = vadd.f32 %v1492, %v1660
    %1662 = vmatmul.bf16.gmra.mxu0 %v845
    %v1663 = vpop.f32.mrf.mxu0
    %v1664 = vadd.f32 %v1495, %v1663
    %v1665 = vpop.f32.mrf.mxu0
    %v1666 = vadd.f32 %v1497, %v1665
    %1667 = vmatmul.bf16.gmra.mxu0 %v849
    %v1668 = vpop.f32.mrf.mxu0
    %v1669 = vadd.f32 %v1500, %v1668
    %v1670 = vpop.f32.mrf.mxu0
    %v1671 = vadd.f32 %v1502, %v1670
    %1672 = vmatmul.bf16.gmra.mxu0 %v853
    %v1673 = vpop.f32.mrf.mxu0
    %v1674 = vadd.f32 %v1505, %v1673
    %v1675 = vpop.f32.mrf.mxu0
    %v1676 = vadd.f32 %v1507, %v1675
    %1677 = vmatmul.bf16.gmra.mxu0 %v857
    %v1678 = vpop.f32.mrf.mxu0
    %v1679 = vadd.f32 %v1510, %v1678
    %v1680 = vpop.f32.mrf.mxu0
    %v1681 = vadd.f32 %v1512, %v1680
    %1682 = vmatmul.bf16.gmra.mxu0 %v861
    %v1683 = vpop.f32.mrf.mxu0
    %v1684 = vadd.f32 %v1515, %v1683
    %v1685 = vpop.f32.mrf.mxu0
    %v1686 = vadd.f32 %v1517, %v1685
    %1687 = vmatmul.bf16.gmra.mxu0 %v865
    %v1688 = vpop.f32.mrf.mxu0
    %v1689 = vadd.f32 %v1520, %v1688
    %v1690 = vpop.f32.mrf.mxu0
    %v1691 = vadd.f32 %v1522, %v1690
    %1692 = vmatmul.bf16.gmra.mxu0 %v869
    %v1693 = vpop.f32.mrf.mxu0
    %v1694 = vadd.f32 %v1525, %v1693
    %v1695 = vpop.f32.mrf.mxu0
    %v1696 = vadd.f32 %v1527, %v1695
    %1697 = vdwg.mxu0
    %1698 = vmatpush.bf16.msra.mxu0 %v1158
    %1699 = vmatpush.bf16.msra.mxu0 %v1157
    %1700 = vmatpush.bf16.msra.mxu0 %v1156
    %1701 = vmatpush.bf16.msra.mxu0 %v1155
    %1702 = vmatpush.bf16.msra.mxu0 %v1154
    %1703 = vmatpush.bf16.msra.mxu0 %v1153
    %1704 = vmatpush.bf16.msra.mxu0 %v1152
    %1705 = vmatpush.bf16.msra.mxu0 %v1151
    %1706 = vmatmul.bf16.gmra.mxu0 %v746
    %v1707 = vpop.f32.mrf.mxu0
    %v1708 = vadd.f32 %v1539, %v1707
    %v1709 = vpop.f32.mrf.mxu0
    %v1710 = vadd.f32 %v1541, %v1709
    %1711 = vmatmul.bf16.gmra.mxu0 %v750
    %v1712 = vpop.f32.mrf.mxu0
    %v1713 = vadd.f32 %v1544, %v1712
    %v1714 = vpop.f32.mrf.mxu0
    %v1715 = vadd.f32 %v1546, %v1714
    %1716 = vmatmul.bf16.gmra.mxu0 %v754
    %v1717 = vpop.f32.mrf.mxu0
    %v1718 = vadd.f32 %v1549, %v1717
    %v1719 = vpop.f32.mrf.mxu0
    %v1720 = vadd.f32 %v1551, %v1719
    %1721 = vmatmul.bf16.gmra.mxu0 %v758
    %v1722 = vpop.f32.mrf.mxu0
    %v1723 = vadd.f32 %v1554, %v1722
    %v1724 = vpop.f32.mrf.mxu0
    %v1725 = vadd.f32 %v1556, %v1724
    %1726 = vmatmul.bf16.gmra.mxu0 %v762
    %v1727 = vpop.f32.mrf.mxu0
    %v1728 = vadd.f32 %v1559, %v1727
    %v1729 = vpop.f32.mrf.mxu0
    %v1730 = vadd.f32 %v1561, %v1729
    %1731 = vmatmul.bf16.gmra.mxu0 %v766
    %v1732 = vpop.f32.mrf.mxu0
    %v1733 = vadd.f32 %v1564, %v1732
    %v1734 = vpop.f32.mrf.mxu0
    %v1735 = vadd.f32 %v1566, %v1734
    %1736 = vmatmul.bf16.gmra.mxu0 %v770
    %v1737 = vpop.f32.mrf.mxu0
    %v1738 = vadd.f32 %v1569, %v1737
    %v1739 = vpop.f32.mrf.mxu0
    %v1740 = vadd.f32 %v1571, %v1739
    %1741 = vmatmul.bf16.gmra.mxu0 %v774
    %v1742 = vpop.f32.mrf.mxu0
    %v1743 = vadd.f32 %v1574, %v1742
    %v1744 = vpop.f32.mrf.mxu0
    %v1745 = vadd.f32 %v1576, %v1744
    %1746 = vmatmul.bf16.gmra.mxu0 %v778
    %v1747 = vpop.f32.mrf.mxu0
    %v1748 = vadd.f32 %v1579, %v1747
    %v1749 = vpop.f32.mrf.mxu0
    %v1750 = vadd.f32 %v1581, %v1749
    %1751 = vmatmul.bf16.gmra.mxu0 %v782
    %v1752 = vpop.f32.mrf.mxu0
    %v1753 = vadd.f32 %v1584, %v1752
    %v1754 = vpop.f32.mrf.mxu0
    %v1755 = vadd.f32 %v1586, %v1754
    %1756 = vmatmul.bf16.gmra.mxu0 %v786
    %v1757 = vpop.f32.mrf.mxu0
    %v1758 = vadd.f32 %v1589, %v1757
    %v1759 = vpop.f32.mrf.mxu0
    %v1760 = vadd.f32 %v1591, %v1759
    %1761 = vmatmul.bf16.gmra.mxu0 %v790
    %v1762 = vpop.f32.mrf.mxu0
    %v1763 = vadd.f32 %v1594, %v1762
    %v1764 = vpop.f32.mrf.mxu0
    %v1765 = vadd.f32 %v1596, %v1764
    %1766 = vmatmul.bf16.gmra.mxu0 %v794
    %v1767 = vpop.f32.mrf.mxu0
    %v1768 = vadd.f32 %v1599, %v1767
    %v1769 = vpop.f32.mrf.mxu0
    %v1770 = vadd.f32 %v1601, %v1769
    %1771 = vmatmul.bf16.gmra.mxu0 %v798
    %v1772 = vpop.f32.mrf.mxu0
    %v1773 = vadd.f32 %v1604, %v1772
    %v1774 = vpop.f32.mrf.mxu0
    %v1775 = vadd.f32 %v1606, %v1774
    %1776 = vmatmul.bf16.gmra.mxu0 %v802
    %v1777 = vpop.f32.mrf.mxu0
    %v1778 = vadd.f32 %v1609, %v1777
    %v1779 = vpop.f32.mrf.mxu0
    %v1780 = vadd.f32 %v1611, %v1779
    %1781 = vmatmul.bf16.gmra.mxu0 %v806
    %v1782 = vpop.f32.mrf.mxu0
    %v1783 = vadd.f32 %v1614, %v1782
    %v1784 = vpop.f32.mrf.mxu0
    %v1785 = vadd.f32 %v1616, %v1784
    %1786 = vmatmul.bf16.gmra.mxu0 %v810
    %v1787 = vpop.f32.mrf.mxu0
    %v1788 = vadd.f32 %v1619, %v1787
    %v1789 = vpop.f32.mrf.mxu0
    %v1790 = vadd.f32 %v1621, %v1789
    %1791 = vmatmul.bf16.gmra.mxu0 %v814
    %v1792 = vpop.f32.mrf.mxu0
    %v1793 = vadd.f32 %v1624, %v1792
    %v1794 = vpop.f32.mrf.mxu0
    %v1795 = vadd.f32 %v1626, %v1794
    %1796 = vmatmul.bf16.gmra.mxu0 %v818
    %v1797 = vpop.f32.mrf.mxu0
    %v1798 = vadd.f32 %v1629, %v1797
    %v1799 = vpop.f32.mrf.mxu0
    %v1800 = vadd.f32 %v1631, %v1799
    %1801 = vmatmul.bf16.gmra.mxu0 %v822
    %v1802 = vpop.f32.mrf.mxu0
    %v1803 = vadd.f32 %v1634, %v1802
    %v1804 = vpop.f32.mrf.mxu0
    %v1805 = vadd.f32 %v1636, %v1804
    %1806 = vmatmul.bf16.gmra.mxu0 %v826
    %v1807 = vpop.f32.mrf.mxu0
    %v1808 = vadd.f32 %v1639, %v1807
    %v1809 = vpop.f32.mrf.mxu0
    %v1810 = vadd.f32 %v1641, %v1809
    %1811 = vmatmul.bf16.gmra.mxu0 %v830
    %v1812 = vpop.f32.mrf.mxu0
    %v1813 = vadd.f32 %v1644, %v1812
    %v1814 = vpop.f32.mrf.mxu0
    %v1815 = vadd.f32 %v1646, %v1814
    %1816 = vmatmul.bf16.gmra.mxu0 %v834
    %v1817 = vpop.f32.mrf.mxu0
    %v1818 = vadd.f32 %v1649, %v1817
    %v1819 = vpop.f32.mrf.mxu0
    %v1820 = vadd.f32 %v1651, %v1819
    %1821 = vmatmul.bf16.gmra.mxu0 %v838
    %v1822 = vpop.f32.mrf.mxu0
    %v1823 = vadd.f32 %v1654, %v1822
    %v1824 = vpop.f32.mrf.mxu0
    %v1825 = vadd.f32 %v1656, %v1824
    %1826 = vmatmul.bf16.gmra.mxu0 %v842
    %v1827 = vpop.f32.mrf.mxu0
    %v1828 = vadd.f32 %v1659, %v1827
    %v1829 = vpop.f32.mrf.mxu0
    %v1830 = vadd.f32 %v1661, %v1829
    %1831 = vmatmul.bf16.gmra.mxu0 %v846
    %v1832 = vpop.f32.mrf.mxu0
    %v1833 = vadd.f32 %v1664, %v1832
    %v1834 = vpop.f32.mrf.mxu0
    %v1835 = vadd.f32 %v1666, %v1834
    %1836 = vmatmul.bf16.gmra.mxu0 %v850
    %v1837 = vpop.f32.mrf.mxu0
    %v1838 = vadd.f32 %v1669, %v1837
    %v1839 = vpop.f32.mrf.mxu0
    %v1840 = vadd.f32 %v1671, %v1839
    %1841 = vmatmul.bf16.gmra.mxu0 %v854
    %v1842 = vpop.f32.mrf.mxu0
    %v1843 = vadd.f32 %v1674, %v1842
    %v1844 = vpop.f32.mrf.mxu0
    %v1845 = vadd.f32 %v1676, %v1844
    %1846 = vmatmul.bf16.gmra.mxu0 %v858
    %v1847 = vpop.f32.mrf.mxu0
    %v1848 = vadd.f32 %v1679, %v1847
    %v1849 = vpop.f32.mrf.mxu0
    %v1850 = vadd.f32 %v1681, %v1849
    %1851 = vmatmul.bf16.gmra.mxu0 %v862
    %v1852 = vpop.f32.mrf.mxu0
    %v1853 = vadd.f32 %v1684, %v1852
    %v1854 = vpop.f32.mrf.mxu0
    %v1855 = vadd.f32 %v1686, %v1854
    %1856 = vmatmul.bf16.gmra.mxu0 %v866
    %v1857 = vpop.f32.mrf.mxu0
    %v1858 = vadd.f32 %v1689, %v1857
    %v1859 = vpop.f32.mrf.mxu0
    %v1860 = vadd.f32 %v1691, %v1859
    %1861 = vmatmul.bf16.gmra.mxu0 %v870
    %v1862 = vpop.f32.mrf.mxu0
    %v1863 = vadd.f32 %v1694, %v1862
    %v1864 = vpop.f32.mrf.mxu0
    %v1865 = vadd.f32 %v1696, %v1864
    %1866 = vdwg.mxu0
    %v1867 = vadd.f32 %v103, %v1708
    %v1868 = vadd.f32 %v104, %v1710
    %v1869 = vadd.f32 %v105, %v1713
    %v1870 = vadd.f32 %v106, %v1715
    %v1871 = vadd.f32 %v107, %v1718
    %v1872 = vadd.f32 %v108, %v1720
    %v1873 = vadd.f32 %v109, %v1723
    %v1874 = vadd.f32 %v110, %v1725
    %v1875 = vadd.f32 %v111, %v1728
    %v1876 = vadd.f32 %v112, %v1730
    %v1877 = vadd.f32 %v113, %v1733
    %v1878 = vadd.f32 %v114, %v1735
    %v1879 = vadd.f32 %v115, %v1738
    %v1880 = vadd.f32 %v116, %v1740
    %v1881 = vadd.f32 %v117, %v1743
    %v1882 = vadd.f32 %v118, %v1745
    %v1883 = vadd.f32 %v119, %v1748
    %v1884 = vadd.f32 %v120, %v1750
    %v1885 = vadd.f32 %v121, %v1753
    %v1886 = vadd.f32 %v122, %v1755
    %v1887 = vadd.f32 %v123, %v1758
    %v1888 = vadd.f32 %v124, %v1760
    %v1889 = vadd.f32 %v125, %v1763
    %v1890 = vadd.f32 %v126, %v1765
    %v1891 = vadd.f32 %v127, %v1768
    %v1892 = vadd.f32 %v128, %v1770
    %v1893 = vadd.f32 %v129, %v1773
    %v1894 = vadd.f32 %v130, %v1775
    %v1895 = vadd.f32 %v131, %v1778
    %v1896 = vadd.f32 %v132, %v1780
    %v1897 = vadd.f32 %v133, %v1783
    %v1898 = vadd.f32 %v134, %v1785
    %v1899 = vadd.f32 %v135, %v1788
    %v1900 = vadd.f32 %v136, %v1790
    %v1901 = vadd.f32 %v137, %v1793
    %v1902 = vadd.f32 %v138, %v1795
    %v1903 = vadd.f32 %v139, %v1798
    %v1904 = vadd.f32 %v140, %v1800
    %v1905 = vadd.f32 %v141, %v1803
    %v1906 = vadd.f32 %v142, %v1805
    %v1907 = vadd.f32 %v143, %v1808
    %v1908 = vadd.f32 %v144, %v1810
    %v1909 = vadd.f32 %v145, %v1813
    %v1910 = vadd.f32 %v146, %v1815
    %v1911 = vadd.f32 %v147, %v1818
    %v1912 = vadd.f32 %v148, %v1820
    %v1913 = vadd.f32 %v149, %v1823
    %v1914 = vadd.f32 %v150, %v1825
    %v1915 = vadd.f32 %v151, %v1828
    %v1916 = vadd.f32 %v152, %v1830
    %v1917 = vadd.f32 %v153, %v1833
    %v1918 = vadd.f32 %v154, %v1835
    %v1919 = vadd.f32 %v155, %v1838
    %v1920 = vadd.f32 %v156, %v1840
    %v1921 = vadd.f32 %v157, %v1843
    %v1922 = vadd.f32 %v158, %v1845
    %v1923 = vadd.f32 %v159, %v1848
    %v1924 = vadd.f32 %v160, %v1850
    %v1925 = vadd.f32 %v161, %v1853
    %v1926 = vadd.f32 %v162, %v1855
    %v1927 = vadd.f32 %v163, %v1858
    %v1928 = vadd.f32 %v164, %v1860
    %v1929 = vadd.f32 %v165, %v1863
    %v1930 = vadd.f32 %v166, %v1865
    %1931 = vst [vmem:[#allocation6] sm:$0xff] %v1867
    %1932 = vst [vmem:[#allocation6 + $0x8] sm:$0xff] %v1868
    %1933 = vst [vmem:[#allocation6 + $0x10] sm:$0xff] %v1869
    %1934 = vst [vmem:[#allocation6 + $0x18] sm:$0xff] %v1870
    %1935 = vst [vmem:[#allocation6 + $0x20] sm:$0xff] %v1871
    %1936 = vst [vmem:[#allocation6 + $0x28] sm:$0xff] %v1872
    %1937 = vst [vmem:[#allocation6 + $0x30] sm:$0xff] %v1873
    %1938 = vst [vmem:[#allocation6 + $0x38] sm:$0xff] %v1874
    %1939 = vst [vmem:[#allocation6 + $0x40] sm:$0xff] %v1875
    %1940 = vst [vmem:[#allocation6 + $0x48] sm:$0xff] %v1876
    %1941 = vst [vmem:[#allocation6 + $0x50] sm:$0xff] %v1877
    %1942 = vst [vmem:[#allocation6 + $0x58] sm:$0xff] %v1878
    %1943 = vst [vmem:[#allocation6 + $0x60] sm:$0xff] %v1879
    %1944 = vst [vmem:[#allocation6 + $0x68] sm:$0xff] %v1880
    %1945 = vst [vmem:[#allocation6 + $0x70] sm:$0xff] %v1881
    %1946 = vst [vmem:[#allocation6 + $0x78] sm:$0xff] %v1882
    %1947 = vst [vmem:[#allocation6 + $0x80] sm:$0xff] %v1883
    %1948 = vst [vmem:[#allocation6 + $0x88] sm:$0xff] %v1884
    %1949 = vst [vmem:[#allocation6 + $0x90] sm:$0xff] %v1885
    %1950 = vst [vmem:[#allocation6 + $0x98] sm:$0xff] %v1886
    %1951 = vst [vmem:[#allocation6 + $0xa0] sm:$0xff] %v1887
    %1952 = vst [vmem:[#allocation6 + $0xa8] sm:$0xff] %v1888
    %1953 = vst [vmem:[#allocation6 + $0xb0] sm:$0xff] %v1889
    %1954 = vst [vmem:[#allocation6 + $0xb8] sm:$0xff] %v1890
    %1955 = vst [vmem:[#allocation6 + $0xc0] sm:$0xff] %v1891
    %1956 = vst [vmem:[#allocation6 + $0xc8] sm:$0xff] %v1892
    %1957 = vst [vmem:[#allocation6 + $0xd0] sm:$0xff] %v1893
    %1958 = vst [vmem:[#allocation6 + $0xd8] sm:$0xff] %v1894
    %1959 = vst [vmem:[#allocation6 + $0xe0] sm:$0xff] %v1895
    %1960 = vst [vmem:[#allocation6 + $0xe8] sm:$0xff] %v1896
    %1961 = vst [vmem:[#allocation6 + $0xf0] sm:$0xff] %v1897
    %1962 = vst [vmem:[#allocation6 + $0xf8] sm:$0xff] %v1898
    %1963 = vst [vmem:[#allocation6 + $0x100] sm:$0xff] %v1899
    %1964 = vst [vmem:[#allocation6 + $0x108] sm:$0xff] %v1900
    %1965 = vst [vmem:[#allocation6 + $0x110] sm:$0xff] %v1901
    %1966 = vst [vmem:[#allocation6 + $0x118] sm:$0xff] %v1902
    %1967 = vst [vmem:[#allocation6 + $0x120] sm:$0xff] %v1903
    %1968 = vst [vmem:[#allocation6 + $0x128] sm:$0xff] %v1904
    %1969 = vst [vmem:[#allocation6 + $0x130] sm:$0xff] %v1905
    %1970 = vst [vmem:[#allocation6 + $0x138] sm:$0xff] %v1906
    %1971 = vst [vmem:[#allocation6 + $0x140] sm:$0xff] %v1907
    %1972 = vst [vmem:[#allocation6 + $0x148] sm:$0xff] %v1908
    %1973 = vst [vmem:[#allocation6 + $0x150] sm:$0xff] %v1909
    %1974 = vst [vmem:[#allocation6 + $0x158] sm:$0xff] %v1910
    %1975 = vst [vmem:[#allocation6 + $0x160] sm:$0xff] %v1911
    %1976 = vst [vmem:[#allocation6 + $0x168] sm:$0xff] %v1912
    %1977 = vst [vmem:[#allocation6 + $0x170] sm:$0xff] %v1913
    %1978 = vst [vmem:[#allocation6 + $0x178] sm:$0xff] %v1914
    %1979 = vst [vmem:[#allocation6 + $0x180] sm:$0xff] %v1915
    %1980 = vst [vmem:[#allocation6 + $0x188] sm:$0xff] %v1916
    %1981 = vst [vmem:[#allocation6 + $0x190] sm:$0xff] %v1917
    %1982 = vst [vmem:[#allocation6 + $0x198] sm:$0xff] %v1918
    %1983 = vst [vmem:[#allocation6 + $0x1a0] sm:$0xff] %v1919
    %1984 = vst [vmem:[#allocation6 + $0x1a8] sm:$0xff] %v1920
    %1985 = vst [vmem:[#allocation6 + $0x1b0] sm:$0xff] %v1921
    %1986 = vst [vmem:[#allocation6 + $0x1b8] sm:$0xff] %v1922
    %1987 = vst [vmem:[#allocation6 + $0x1c0] sm:$0xff] %v1923
    %1988 = vst [vmem:[#allocation6 + $0x1c8] sm:$0xff] %v1924
    %1989 = vst [vmem:[#allocation6 + $0x1d0] sm:$0xff] %v1925
    %1990 = vst [vmem:[#allocation6 + $0x1d8] sm:$0xff] %v1926
    %1991 = vst [vmem:[#allocation6 + $0x1e0] sm:$0xff] %v1927
    %1992 = vst [vmem:[#allocation6 + $0x1e8] sm:$0xff] %v1928
    %1993 = vst [vmem:[#allocation6 + $0x1f0] sm:$0xff] %v1929
    %1994 = vst [vmem:[#allocation6 + $0x1f8] sm:$0xff] %v1930
    // Predicated region
    $region26: #{tpu_custom_call.1} parent=1 // pred_check
      %p1995 = pneg %p35
    $region27: #{tpu_custom_call.1} parent=1 // pred_check_branch
      %1997 = sbr.rel (%p1995) target = $region29
    $region28: #{tpu_custom_call.1} parent=1 // pred_region
      %v1998 = vld [vmem:[%s2] sm:$0xff]
      %v1999 = vld [vmem:[%s2 + $0x8] sm:$0xff]
      %v2000 = vld [vmem:[%s2 + $0x10] sm:$0xff]
      %v2001 = vld [vmem:[%s2 + $0x18] sm:$0xff]
      %v2002 = vld [vmem:[%s2 + $0x20] sm:$0xff]
      %v2003 = vld [vmem:[%s2 + $0x28] sm:$0xff]
      %v2004 = vld [vmem:[%s2 + $0x30] sm:$0xff]
      %v2005 = vld [vmem:[%s2 + $0x38] sm:$0xff]
      %v2006 = vld [vmem:[%s2 + $0x40] sm:$0xff]
      %v2007 = vld [vmem:[%s2 + $0x48] sm:$0xff]
      %v2008 = vld [vmem:[%s2 + $0x50] sm:$0xff]
      %v2009 = vld [vmem:[%s2 + $0x58] sm:$0xff]
      %v2010 = vld [vmem:[%s2 + $0x60] sm:$0xff]
      %v2011 = vld [vmem:[%s2 + $0x68] sm:$0xff]
      %v2012 = vld [vmem:[%s2 + $0x70] sm:$0xff]
      %v2013 = vld [vmem:[%s2 + $0x78] sm:$0xff]
      %v2014 = vld [vmem:[%s2 + $0x80] sm:$0xff]
      %v2015 = vld [vmem:[%s2 + $0x88] sm:$0xff]
      %v2016 = vld [vmem:[%s2 + $0x90] sm:$0xff]
      %v2017 = vld [vmem:[%s2 + $0x98] sm:$0xff]
      %v2018 = vld [vmem:[%s2 + $0xa0] sm:$0xff]
      %v2019 = vld [vmem:[%s2 + $0xa8] sm:$0xff]
      %v2020 = vld [vmem:[%s2 + $0xb0] sm:$0xff]
      %v2021 = vld [vmem:[%s2 + $0xb8] sm:$0xff]
      %v2022 = vld [vmem:[%s2 + $0xc0] sm:$0xff]
      %v2023 = vld [vmem:[%s2 + $0xc8] sm:$0xff]
      %v2024 = vld [vmem:[%s2 + $0xd0] sm:$0xff]
      %v2025 = vld [vmem:[%s2 + $0xd8] sm:$0xff]
      %v2026 = vld [vmem:[%s2 + $0xe0] sm:$0xff]
      %v2027 = vld [vmem:[%s2 + $0xe8] sm:$0xff]
      %v2028 = vld [vmem:[%s2 + $0xf0] sm:$0xff]
      %v2029 = vld [vmem:[%s2 + $0xf8] sm:$0xff]
      %v2030 = vld [vmem:[%s2 + $0x100] sm:$0xff]
      %v2031 = vld [vmem:[%s2 + $0x108] sm:$0xff]
      %v2032 = vld [vmem:[%s2 + $0x110] sm:$0xff]
      %v2033 = vld [vmem:[%s2 + $0x118] sm:$0xff]
      %v2034 = vld [vmem:[%s2 + $0x120] sm:$0xff]
      %v2035 = vld [vmem:[%s2 + $0x128] sm:$0xff]
      %v2036 = vld [vmem:[%s2 + $0x130] sm:$0xff]
      %v2037 = vld [vmem:[%s2 + $0x138] sm:$0xff]
      %v2038 = vld [vmem:[%s2 + $0x140] sm:$0xff]
      %v2039 = vld [vmem:[%s2 + $0x148] sm:$0xff]
      %v2040 = vld [vmem:[%s2 + $0x150] sm:$0xff]
      %v2041 = vld [vmem:[%s2 + $0x158] sm:$0xff]
      %v2042 = vld [vmem:[%s2 + $0x160] sm:$0xff]
      %v2043 = vld [vmem:[%s2 + $0x168] sm:$0xff]
      %v2044 = vld [vmem:[%s2 + $0x170] sm:$0xff]
      %v2045 = vld [vmem:[%s2 + $0x178] sm:$0xff]
      %v2046 = vld [vmem:[%s2 + $0x180] sm:$0xff]
      %v2047 = vld [vmem:[%s2 + $0x188] sm:$0xff]
      %v2048 = vld [vmem:[%s2 + $0x190] sm:$0xff]
      %v2049 = vld [vmem:[%s2 + $0x198] sm:$0xff]
      %v2050 = vld [vmem:[%s2 + $0x1a0] sm:$0xff]
      %v2051 = vld [vmem:[%s2 + $0x1a8] sm:$0xff]
      %v2052 = vld [vmem:[%s2 + $0x1b0] sm:$0xff]
      %v2053 = vld [vmem:[%s2 + $0x1b8] sm:$0xff]
      %v2054 = vld [vmem:[%s2 + $0x1c0] sm:$0xff]
      %v2055 = vld [vmem:[%s2 + $0x1c8] sm:$0xff]
      %v2056 = vld [vmem:[%s2 + $0x1d0] sm:$0xff]
      %v2057 = vld [vmem:[%s2 + $0x1d8] sm:$0xff]
      %v2058 = vld [vmem:[%s2 + $0x1e0] sm:$0xff]
      %v2059 = vld [vmem:[%s2 + $0x1e8] sm:$0xff]
      %v2060 = vld [vmem:[%s2 + $0x1f0] sm:$0xff]
      %v2061 = vld [vmem:[%s2 + $0x1f8] sm:$0xff]
      %v2062 = vld [vmem:[#allocation6] sm:$0xff]
      %v2063 = vld [vmem:[#allocation6 + $0x8] sm:$0xff]
      %v2064 = vld [vmem:[#allocation6 + $0x10] sm:$0xff]
      %v2065 = vld [vmem:[#allocation6 + $0x18] sm:$0xff]
      %v2066 = vld [vmem:[#allocation6 + $0x20] sm:$0xff]
      %v2067 = vld [vmem:[#allocation6 + $0x28] sm:$0xff]
      %v2068 = vld [vmem:[#allocation6 + $0x30] sm:$0xff]
      %v2069 = vld [vmem:[#allocation6 + $0x38] sm:$0xff]
      %v2070 = vld [vmem:[#allocation6 + $0x40] sm:$0xff]
      %v2071 = vld [vmem:[#allocation6 + $0x48] sm:$0xff]
      %v2072 = vld [vmem:[#allocation6 + $0x50] sm:$0xff]
      %v2073 = vld [vmem:[#allocation6 + $0x58] sm:$0xff]
      %v2074 = vld [vmem:[#allocation6 + $0x60] sm:$0xff]
      %v2075 = vld [vmem:[#allocation6 + $0x68] sm:$0xff]
      %v2076 = vld [vmem:[#allocation6 + $0x70] sm:$0xff]
      %v2077 = vld [vmem:[#allocation6 + $0x78] sm:$0xff]
      %v2078 = vld [vmem:[#allocation6 + $0x80] sm:$0xff]
      %v2079 = vld [vmem:[#allocation6 + $0x88] sm:$0xff]
      %v2080 = vld [vmem:[#allocation6 + $0x90] sm:$0xff]
      %v2081 = vld [vmem:[#allocation6 + $0x98] sm:$0xff]
      %v2082 = vld [vmem:[#allocation6 + $0xa0] sm:$0xff]
      %v2083 = vld [vmem:[#allocation6 + $0xa8] sm:$0xff]
      %v2084 = vld [vmem:[#allocation6 + $0xb0] sm:$0xff]
      %v2085 = vld [vmem:[#allocation6 + $0xb8] sm:$0xff]
      %v2086 = vld [vmem:[#allocation6 + $0xc0] sm:$0xff]
      %v2087 = vld [vmem:[#allocation6 + $0xc8] sm:$0xff]
      %v2088 = vld [vmem:[#allocation6 + $0xd0] sm:$0xff]
      %v2089 = vld [vmem:[#allocation6 + $0xd8] sm:$0xff]
      %v2090 = vld [vmem:[#allocation6 + $0xe0] sm:$0xff]
      %v2091 = vld [vmem:[#allocation6 + $0xe8] sm:$0xff]
      %v2092 = vld [vmem:[#allocation6 + $0xf0] sm:$0xff]
      %v2093 = vld [vmem:[#allocation6 + $0xf8] sm:$0xff]
      %v2094 = vld [vmem:[#allocation6 + $0x100] sm:$0xff]
      %v2095 = vld [vmem:[#allocation6 + $0x108] sm:$0xff]
      %v2096 = vld [vmem:[#allocation6 + $0x110] sm:$0xff]
      %v2097 = vld [vmem:[#allocation6 + $0x118] sm:$0xff]
      %v2098 = vld [vmem:[#allocation6 + $0x120] sm:$0xff]
      %v2099 = vld [vmem:[#allocation6 + $0x128] sm:$0xff]
      %v2100 = vld [vmem:[#allocation6 + $0x130] sm:$0xff]
      %v2101 = vld [vmem:[#allocation6 + $0x138] sm:$0xff]
      %v2102 = vld [vmem:[#allocation6 + $0x140] sm:$0xff]
      %v2103 = vld [vmem:[#allocation6 + $0x148] sm:$0xff]
      %v2104 = vld [vmem:[#allocation6 + $0x150] sm:$0xff]
      %v2105 = vld [vmem:[#allocation6 + $0x158] sm:$0xff]
      %v2106 = vld [vmem:[#allocation6 + $0x160] sm:$0xff]
      %v2107 = vld [vmem:[#allocation6 + $0x168] sm:$0xff]
      %v2108 = vld [vmem:[#allocation6 + $0x170] sm:$0xff]
      %v2109 = vld [vmem:[#allocation6 + $0x178] sm:$0xff]
      %v2110 = vld [vmem:[#allocation6 + $0x180] sm:$0xff]
      %v2111 = vld [vmem:[#allocation6 + $0x188] sm:$0xff]
      %v2112 = vld [vmem:[#allocation6 + $0x190] sm:$0xff]
      %v2113 = vld [vmem:[#allocation6 + $0x198] sm:$0xff]
      %v2114 = vld [vmem:[#allocation6 + $0x1a0] sm:$0xff]
      %v2115 = vld [vmem:[#allocation6 + $0x1a8] sm:$0xff]
      %v2116 = vld [vmem:[#allocation6 + $0x1b0] sm:$0xff]
      %v2117 = vld [vmem:[#allocation6 + $0x1b8] sm:$0xff]
      %v2118 = vld [vmem:[#allocation6 + $0x1c0] sm:$0xff]
      %v2119 = vld [vmem:[#allocation6 + $0x1c8] sm:$0xff]
      %v2120 = vld [vmem:[#allocation6 + $0x1d0] sm:$0xff]
      %v2121 = vld [vmem:[#allocation6 + $0x1d8] sm:$0xff]
      %v2122 = vld [vmem:[#allocation6 + $0x1e0] sm:$0xff]
      %v2123 = vld [vmem:[#allocation6 + $0x1e8] sm:$0xff]
      %v2124 = vld [vmem:[#allocation6 + $0x1f0] sm:$0xff]
      %v2125 = vld [vmem:[#allocation6 + $0x1f8] sm:$0xff]
      %2127 = vset.pattern.permute.xlu0 0
      %2128 = vperm.xlu0 %2127, %v1998
      %v2129 = vpop.permute.xlu0 %2128
      %2132 = vset.pattern.permute.xlu0 0
      %2133 = vperm.xlu0 %2132, %v1999
      %v2134 = vpop.permute.xlu0 %2133
      %2137 = vset.pattern.permute.xlu0 0
      %2138 = vperm.xlu0 %2137, %v2000
      %v2139 = vpop.permute.xlu0 %2138
      %2142 = vset.pattern.permute.xlu0 0
      %2143 = vperm.xlu0 %2142, %v2001
      %v2144 = vpop.permute.xlu0 %2143
      %2147 = vset.pattern.permute.xlu0 0
      %2148 = vperm.xlu0 %2147, %v2002
      %v2149 = vpop.permute.xlu0 %2148
      %2152 = vset.pattern.permute.xlu0 0
      %2153 = vperm.xlu0 %2152, %v2003
      %v2154 = vpop.permute.xlu0 %2153
      %2157 = vset.pattern.permute.xlu0 0
      %2158 = vperm.xlu0 %2157, %v2004
      %v2159 = vpop.permute.xlu0 %2158
      %2162 = vset.pattern.permute.xlu0 0
      %2163 = vperm.xlu0 %2162, %v2005
      %v2164 = vpop.permute.xlu0 %2163
      %2167 = vset.pattern.permute.xlu0 0
      %2168 = vperm.xlu0 %2167, %v2006
      %v2169 = vpop.permute.xlu0 %2168
      %2172 = vset.pattern.permute.xlu0 0
      %2173 = vperm.xlu0 %2172, %v2007
      %v2174 = vpop.permute.xlu0 %2173
      %2177 = vset.pattern.permute.xlu0 0
      %2178 = vperm.xlu0 %2177, %v2008
      %v2179 = vpop.permute.xlu0 %2178
      %2182 = vset.pattern.permute.xlu0 0
      %2183 = vperm.xlu0 %2182, %v2009
      %v2184 = vpop.permute.xlu0 %2183
      %2187 = vset.pattern.permute.xlu0 0
      %2188 = vperm.xlu0 %2187, %v2010
      %v2189 = vpop.permute.xlu0 %2188
      %2192 = vset.pattern.permute.xlu0 0
      %2193 = vperm.xlu0 %2192, %v2011
      %v2194 = vpop.permute.xlu0 %2193
      %2197 = vset.pattern.permute.xlu0 0
      %2198 = vperm.xlu0 %2197, %v2012
      %v2199 = vpop.permute.xlu0 %2198
      %2202 = vset.pattern.permute.xlu0 0
      %2203 = vperm.xlu0 %2202, %v2013
      %v2204 = vpop.permute.xlu0 %2203
      %2207 = vset.pattern.permute.xlu0 0
      %2208 = vperm.xlu0 %2207, %v2014
      %v2209 = vpop.permute.xlu0 %2208
      %2212 = vset.pattern.permute.xlu0 0
      %2213 = vperm.xlu0 %2212, %v2015
      %v2214 = vpop.permute.xlu0 %2213
      %2217 = vset.pattern.permute.xlu0 0
      %2218 = vperm.xlu0 %2217, %v2016
      %v2219 = vpop.permute.xlu0 %2218
      %2222 = vset.pattern.permute.xlu0 0
      %2223 = vperm.xlu0 %2222, %v2017
      %v2224 = vpop.permute.xlu0 %2223
      %2227 = vset.pattern.permute.xlu0 0
      %2228 = vperm.xlu0 %2227, %v2018
      %v2229 = vpop.permute.xlu0 %2228
      %2232 = vset.pattern.permute.xlu0 0
      %2233 = vperm.xlu0 %2232, %v2019
      %v2234 = vpop.permute.xlu0 %2233
      %2237 = vset.pattern.permute.xlu0 0
      %2238 = vperm.xlu0 %2237, %v2020
      %v2239 = vpop.permute.xlu0 %2238
      %2242 = vset.pattern.permute.xlu0 0
      %2243 = vperm.xlu0 %2242, %v2021
      %v2244 = vpop.permute.xlu0 %2243
      %2247 = vset.pattern.permute.xlu0 0
      %2248 = vperm.xlu0 %2247, %v2022
      %v2249 = vpop.permute.xlu0 %2248
      %2252 = vset.pattern.permute.xlu0 0
      %2253 = vperm.xlu0 %2252, %v2023
      %v2254 = vpop.permute.xlu0 %2253
      %2257 = vset.pattern.permute.xlu0 0
      %2258 = vperm.xlu0 %2257, %v2024
      %v2259 = vpop.permute.xlu0 %2258
      %2262 = vset.pattern.permute.xlu0 0
      %2263 = vperm.xlu0 %2262, %v2025
      %v2264 = vpop.permute.xlu0 %2263
      %2267 = vset.pattern.permute.xlu0 0
      %2268 = vperm.xlu0 %2267, %v2026
      %v2269 = vpop.permute.xlu0 %2268
      %2272 = vset.pattern.permute.xlu0 0
      %2273 = vperm.xlu0 %2272, %v2027
      %v2274 = vpop.permute.xlu0 %2273
      %2277 = vset.pattern.permute.xlu0 0
      %2278 = vperm.xlu0 %2277, %v2028
      %v2279 = vpop.permute.xlu0 %2278
      %2282 = vset.pattern.permute.xlu0 0
      %2283 = vperm.xlu0 %2282, %v2029
      %v2284 = vpop.permute.xlu0 %2283
      %2287 = vset.pattern.permute.xlu0 0
      %2288 = vperm.xlu0 %2287, %v2030
      %v2289 = vpop.permute.xlu0 %2288
      %2292 = vset.pattern.permute.xlu0 0
      %2293 = vperm.xlu0 %2292, %v2031
      %v2294 = vpop.permute.xlu0 %2293
      %2297 = vset.pattern.permute.xlu0 0
      %2298 = vperm.xlu0 %2297, %v2032
      %v2299 = vpop.permute.xlu0 %2298
      %2302 = vset.pattern.permute.xlu0 0
      %2303 = vperm.xlu0 %2302, %v2033
      %v2304 = vpop.permute.xlu0 %2303
      %2307 = vset.pattern.permute.xlu0 0
      %2308 = vperm.xlu0 %2307, %v2034
      %v2309 = vpop.permute.xlu0 %2308
      %2312 = vset.pattern.permute.xlu0 0
      %2313 = vperm.xlu0 %2312, %v2035
      %v2314 = vpop.permute.xlu0 %2313
      %2317 = vset.pattern.permute.xlu0 0
      %2318 = vperm.xlu0 %2317, %v2036
      %v2319 = vpop.permute.xlu0 %2318
      %2322 = vset.pattern.permute.xlu0 0
      %2323 = vperm.xlu0 %2322, %v2037
      %v2324 = vpop.permute.xlu0 %2323
      %2327 = vset.pattern.permute.xlu0 0
      %2328 = vperm.xlu0 %2327, %v2038
      %v2329 = vpop.permute.xlu0 %2328
      %2332 = vset.pattern.permute.xlu0 0
      %2333 = vperm.xlu0 %2332, %v2039
      %v2334 = vpop.permute.xlu0 %2333
      %2337 = vset.pattern.permute.xlu0 0
      %2338 = vperm.xlu0 %2337, %v2040
      %v2339 = vpop.permute.xlu0 %2338
      %2342 = vset.pattern.permute.xlu0 0
      %2343 = vperm.xlu0 %2342, %v2041
      %v2344 = vpop.permute.xlu0 %2343
      %2347 = vset.pattern.permute.xlu0 0
      %2348 = vperm.xlu0 %2347, %v2042
      %v2349 = vpop.permute.xlu0 %2348
      %2352 = vset.pattern.permute.xlu0 0
      %2353 = vperm.xlu0 %2352, %v2043
      %v2354 = vpop.permute.xlu0 %2353
      %2357 = vset.pattern.permute.xlu0 0
      %2358 = vperm.xlu0 %2357, %v2044
      %v2359 = vpop.permute.xlu0 %2358
      %2362 = vset.pattern.permute.xlu0 0
      %2363 = vperm.xlu0 %2362, %v2045
      %v2364 = vpop.permute.xlu0 %2363
      %2367 = vset.pattern.permute.xlu0 0
      %2368 = vperm.xlu0 %2367, %v2046
      %v2369 = vpop.permute.xlu0 %2368
      %2372 = vset.pattern.permute.xlu0 0
      %2373 = vperm.xlu0 %2372, %v2047
      %v2374 = vpop.permute.xlu0 %2373
      %2377 = vset.pattern.permute.xlu0 0
      %2378 = vperm.xlu0 %2377, %v2048
      %v2379 = vpop.permute.xlu0 %2378
      %2382 = vset.pattern.permute.xlu0 0
      %2383 = vperm.xlu0 %2382, %v2049
      %v2384 = vpop.permute.xlu0 %2383
      %2387 = vset.pattern.permute.xlu0 0
      %2388 = vperm.xlu0 %2387, %v2050
      %v2389 = vpop.permute.xlu0 %2388
      %2392 = vset.pattern.permute.xlu0 0
      %2393 = vperm.xlu0 %2392, %v2051
      %v2394 = vpop.permute.xlu0 %2393
      %2397 = vset.pattern.permute.xlu0 0
      %2398 = vperm.xlu0 %2397, %v2052
      %v2399 = vpop.permute.xlu0 %2398
      %2402 = vset.pattern.permute.xlu0 0
      %2403 = vperm.xlu0 %2402, %v2053
      %v2404 = vpop.permute.xlu0 %2403
      %2407 = vset.pattern.permute.xlu0 0
      %2408 = vperm.xlu0 %2407, %v2054
      %v2409 = vpop.permute.xlu0 %2408
      %2412 = vset.pattern.permute.xlu0 0
      %2413 = vperm.xlu0 %2412, %v2055
      %v2414 = vpop.permute.xlu0 %2413
      %2417 = vset.pattern.permute.xlu0 0
      %2418 = vperm.xlu0 %2417, %v2056
      %v2419 = vpop.permute.xlu0 %2418
      %2422 = vset.pattern.permute.xlu0 0
      %2423 = vperm.xlu0 %2422, %v2057
      %v2424 = vpop.permute.xlu0 %2423
      %2427 = vset.pattern.permute.xlu0 0
      %2428 = vperm.xlu0 %2427, %v2058
      %v2429 = vpop.permute.xlu0 %2428
      %2432 = vset.pattern.permute.xlu0 0
      %2433 = vperm.xlu0 %2432, %v2059
      %v2434 = vpop.permute.xlu0 %2433
      %2437 = vset.pattern.permute.xlu0 0
      %2438 = vperm.xlu0 %2437, %v2060
      %v2439 = vpop.permute.xlu0 %2438
      %2442 = vset.pattern.permute.xlu0 0
      %2443 = vperm.xlu0 %2442, %v2061
      %v2444 = vpop.permute.xlu0 %2443
      %v2446 = vmul.f32 %v2129, %v2062
      %v2447 = vmul.f32 %v2134, %v2063
      %v2448 = vmul.f32 %v2139, %v2064
      %v2449 = vmul.f32 %v2144, %v2065
      %v2450 = vmul.f32 %v2149, %v2066
      %v2451 = vmul.f32 %v2154, %v2067
      %v2452 = vmul.f32 %v2159, %v2068
      %v2453 = vmul.f32 %v2164, %v2069
      %v2454 = vmul.f32 %v2169, %v2070
      %v2455 = vmul.f32 %v2174, %v2071
      %v2456 = vmul.f32 %v2179, %v2072
      %v2457 = vmul.f32 %v2184, %v2073
      %v2458 = vmul.f32 %v2189, %v2074
      %v2459 = vmul.f32 %v2194, %v2075
      %v2460 = vmul.f32 %v2199, %v2076
      %v2461 = vmul.f32 %v2204, %v2077
      %v2462 = vmul.f32 %v2209, %v2078
      %v2463 = vmul.f32 %v2214, %v2079
      %v2464 = vmul.f32 %v2219, %v2080
      %v2465 = vmul.f32 %v2224, %v2081
      %v2466 = vmul.f32 %v2229, %v2082
      %v2467 = vmul.f32 %v2234, %v2083
      %v2468 = vmul.f32 %v2239, %v2084
      %v2469 = vmul.f32 %v2244, %v2085
      %v2470 = vmul.f32 %v2249, %v2086
      %v2471 = vmul.f32 %v2254, %v2087
      %v2472 = vmul.f32 %v2259, %v2088
      %v2473 = vmul.f32 %v2264, %v2089
      %v2474 = vmul.f32 %v2269, %v2090
      %v2475 = vmul.f32 %v2274, %v2091
      %v2476 = vmul.f32 %v2279, %v2092
      %v2477 = vmul.f32 %v2284, %v2093
      %v2478 = vmul.f32 %v2289, %v2094
      %v2479 = vmul.f32 %v2294, %v2095
      %v2480 = vmul.f32 %v2299, %v2096
      %v2481 = vmul.f32 %v2304, %v2097
      %v2482 = vmul.f32 %v2309, %v2098
      %v2483 = vmul.f32 %v2314, %v2099
      %v2484 = vmul.f32 %v2319, %v2100
      %v2485 = vmul.f32 %v2324, %v2101
      %v2486 = vmul.f32 %v2329, %v2102
      %v2487 = vmul.f32 %v2334, %v2103
      %v2488 = vmul.f32 %v2339, %v2104
      %v2489 = vmul.f32 %v2344, %v2105
      %v2490 = vmul.f32 %v2349, %v2106
      %v2491 = vmul.f32 %v2354, %v2107
      %v2492 = vmul.f32 %v2359, %v2108
      %v2493 = vmul.f32 %v2364, %v2109
      %v2494 = vmul.f32 %v2369, %v2110
      %v2495 = vmul.f32 %v2374, %v2111
      %v2496 = vmul.f32 %v2379, %v2112
      %v2497 = vmul.f32 %v2384, %v2113
      %v2498 = vmul.f32 %v2389, %v2114
      %v2499 = vmul.f32 %v2394, %v2115
      %v2500 = vmul.f32 %v2399, %v2116
      %v2501 = vmul.f32 %v2404, %v2117
      %v2502 = vmul.f32 %v2409, %v2118
      %v2503 = vmul.f32 %v2414, %v2119
      %v2504 = vmul.f32 %v2419, %v2120
      %v2505 = vmul.f32 %v2424, %v2121
      %v2506 = vmul.f32 %v2429, %v2122
      %v2507 = vmul.f32 %v2434, %v2123
      %v2508 = vmul.f32 %v2439, %v2124
      %v2509 = vmul.f32 %v2444, %v2125
      %s2510 = sld [smem:[#allocation2]]
      %vm2511 = vcmp.gt.f32.partialorder %v2446, 0.0
      %vm2512 = vcmp.gt.f32.partialorder %v2447, 0.0
      %vm2513 = vcmp.gt.f32.partialorder %v2448, 0.0
      %vm2514 = vcmp.gt.f32.partialorder %v2449, 0.0
      %vm2515 = vcmp.gt.f32.partialorder %v2450, 0.0
      %vm2516 = vcmp.gt.f32.partialorder %v2451, 0.0
      %vm2517 = vcmp.gt.f32.partialorder %v2452, 0.0
      %vm2518 = vcmp.gt.f32.partialorder %v2453, 0.0
      %vm2519 = vcmp.gt.f32.partialorder %v2454, 0.0
      %vm2520 = vcmp.gt.f32.partialorder %v2455, 0.0
      %vm2521 = vcmp.gt.f32.partialorder %v2456, 0.0
      %vm2522 = vcmp.gt.f32.partialorder %v2457, 0.0
      %vm2523 = vcmp.gt.f32.partialorder %v2458, 0.0
      %vm2524 = vcmp.gt.f32.partialorder %v2459, 0.0
      %vm2525 = vcmp.gt.f32.partialorder %v2460, 0.0
      %vm2526 = vcmp.gt.f32.partialorder %v2461, 0.0
      %vm2527 = vcmp.gt.f32.partialorder %v2462, 0.0
      %vm2528 = vcmp.gt.f32.partialorder %v2463, 0.0
      %vm2529 = vcmp.gt.f32.partialorder %v2464, 0.0
      %vm2530 = vcmp.gt.f32.partialorder %v2465, 0.0
      %vm2531 = vcmp.gt.f32.partialorder %v2466, 0.0
      %vm2532 = vcmp.gt.f32.partialorder %v2467, 0.0
      %vm2533 = vcmp.gt.f32.partialorder %v2468, 0.0
      %vm2534 = vcmp.gt.f32.partialorder %v2469, 0.0
      %vm2535 = vcmp.gt.f32.partialorder %v2470, 0.0
      %vm2536 = vcmp.gt.f32.partialorder %v2471, 0.0
      %vm2537 = vcmp.gt.f32.partialorder %v2472, 0.0
      %vm2538 = vcmp.gt.f32.partialorder %v2473, 0.0
      %vm2539 = vcmp.gt.f32.partialorder %v2474, 0.0
      %vm2540 = vcmp.gt.f32.partialorder %v2475, 0.0
      %vm2541 = vcmp.gt.f32.partialorder %v2476, 0.0
      %vm2542 = vcmp.gt.f32.partialorder %v2477, 0.0
      %vm2543 = vcmp.gt.f32.partialorder %v2478, 0.0
      %vm2544 = vcmp.gt.f32.partialorder %v2479, 0.0
      %vm2545 = vcmp.gt.f32.partialorder %v2480, 0.0
      %vm2546 = vcmp.gt.f32.partialorder %v2481, 0.0
      %vm2547 = vcmp.gt.f32.partialorder %v2482, 0.0
      %vm2548 = vcmp.gt.f32.partialorder %v2483, 0.0
      %vm2549 = vcmp.gt.f32.partialorder %v2484, 0.0
      %vm2550 = vcmp.gt.f32.partialorder %v2485, 0.0
      %vm2551 = vcmp.gt.f32.partialorder %v2486, 0.0
      %vm2552 = vcmp.gt.f32.partialorder %v2487, 0.0
      %vm2553 = vcmp.gt.f32.partialorder %v2488, 0.0
      %vm2554 = vcmp.gt.f32.partialorder %v2489, 0.0
      %vm2555 = vcmp.gt.f32.partialorder %v2490, 0.0
      %vm2556 = vcmp.gt.f32.partialorder %v2491, 0.0
      %vm2557 = vcmp.gt.f32.partialorder %v2492, 0.0
      %vm2558 = vcmp.gt.f32.partialorder %v2493, 0.0
      %vm2559 = vcmp.gt.f32.partialorder %v2494, 0.0
      %vm2560 = vcmp.gt.f32.partialorder %v2495, 0.0
      %vm2561 = vcmp.gt.f32.partialorder %v2496, 0.0
      %vm2562 = vcmp.gt.f32.partialorder %v2497, 0.0
      %vm2563 = vcmp.gt.f32.partialorder %v2498, 0.0
      %vm2564 = vcmp.gt.f32.partialorder %v2499, 0.0
      %vm2565 = vcmp.gt.f32.partialorder %v2500, 0.0
      %vm2566 = vcmp.gt.f32.partialorder %v2501, 0.0
      %vm2567 = vcmp.gt.f32.partialorder %v2502, 0.0
      %vm2568 = vcmp.gt.f32.partialorder %v2503, 0.0
      %vm2569 = vcmp.gt.f32.partialorder %v2504, 0.0
      %vm2570 = vcmp.gt.f32.partialorder %v2505, 0.0
      %vm2571 = vcmp.gt.f32.partialorder %v2506, 0.0
      %vm2572 = vcmp.gt.f32.partialorder %v2507, 0.0
      %vm2573 = vcmp.gt.f32.partialorder %v2508, 0.0
      %vm2574 = vcmp.gt.f32.partialorder %v2509, 0.0
      %v2575 = vstv %s2510
      %v2576 = vmul.f32 %v2575, %v2446
      %v2577 = vmul.f32 %v2575, %v2447
      %v2578 = vmul.f32 %v2575, %v2448
      %v2579 = vmul.f32 %v2575, %v2449
      %v2580 = vmul.f32 %v2575, %v2450
      %v2581 = vmul.f32 %v2575, %v2451
      %v2582 = vmul.f32 %v2575, %v2452
      %v2583 = vmul.f32 %v2575, %v2453
      %v2584 = vmul.f32 %v2575, %v2454
      %v2585 = vmul.f32 %v2575, %v2455
      %v2586 = vmul.f32 %v2575, %v2456
      %v2587 = vmul.f32 %v2575, %v2457
      %v2588 = vmul.f32 %v2575, %v2458
      %v2589 = vmul.f32 %v2575, %v2459
      %v2590 = vmul.f32 %v2575, %v2460
      %v2591 = vmul.f32 %v2575, %v2461
      %v2592 = vmul.f32 %v2575, %v2462
      %v2593 = vmul.f32 %v2575, %v2463
      %v2594 = vmul.f32 %v2575, %v2464
      %v2595 = vmul.f32 %v2575, %v2465
      %v2596 = vmul.f32 %v2575, %v2466
      %v2597 = vmul.f32 %v2575, %v2467
      %v2598 = vmul.f32 %v2575, %v2468
      %v2599 = vmul.f32 %v2575, %v2469
      %v2600 = vmul.f32 %v2575, %v2470
      %v2601 = vmul.f32 %v2575, %v2471
      %v2602 = vmul.f32 %v2575, %v2472
      %v2603 = vmul.f32 %v2575, %v2473
      %v2604 = vmul.f32 %v2575, %v2474
      %v2605 = vmul.f32 %v2575, %v2475
      %v2606 = vmul.f32 %v2575, %v2476
      %v2607 = vmul.f32 %v2575, %v2477
      %v2608 = vmul.f32 %v2575, %v2478
      %v2609 = vmul.f32 %v2575, %v2479
      %v2610 = vmul.f32 %v2575, %v2480
      %v2611 = vmul.f32 %v2575, %v2481
      %v2612 = vmul.f32 %v2575, %v2482
      %v2613 = vmul.f32 %v2575, %v2483
      %v2614 = vmul.f32 %v2575, %v2484
      %v2615 = vmul.f32 %v2575, %v2485
      %v2616 = vmul.f32 %v2575, %v2486
      %v2617 = vmul.f32 %v2575, %v2487
      %v2618 = vmul.f32 %v2575, %v2488
      %v2619 = vmul.f32 %v2575, %v2489
      %v2620 = vmul.f32 %v2575, %v2490
      %v2621 = vmul.f32 %v2575, %v2491
      %v2622 = vmul.f32 %v2575, %v2492
      %v2623 = vmul.f32 %v2575, %v2493
      %v2624 = vmul.f32 %v2575, %v2494
      %v2625 = vmul.f32 %v2575, %v2495
      %v2626 = vmul.f32 %v2575, %v2496
      %v2627 = vmul.f32 %v2575, %v2497
      %v2628 = vmul.f32 %v2575, %v2498
      %v2629 = vmul.f32 %v2575, %v2499
      %v2630 = vmul.f32 %v2575, %v2500
      %v2631 = vmul.f32 %v2575, %v2501
      %v2632 = vmul.f32 %v2575, %v2502
      %v2633 = vmul.f32 %v2575, %v2503
      %v2634 = vmul.f32 %v2575, %v2504
      %v2635 = vmul.f32 %v2575, %v2505
      %v2636 = vmul.f32 %v2575, %v2506
      %v2637 = vmul.f32 %v2575, %v2507
      %v2638 = vmul.f32 %v2575, %v2508
      %v2639 = vmul.f32 %v2575, %v2509
      %v2640 = vsel %vm2511, %v2446, %v2576
      %v2641 = vsel %vm2512, %v2447, %v2577
      %v2642 = vsel %vm2513, %v2448, %v2578
      %v2643 = vsel %vm2514, %v2449, %v2579
      %v2644 = vsel %vm2515, %v2450, %v2580
      %v2645 = vsel %vm2516, %v2451, %v2581
      %v2646 = vsel %vm2517, %v2452, %v2582
      %v2647 = vsel %vm2518, %v2453, %v2583
      %v2648 = vsel %vm2519, %v2454, %v2584
      %v2649 = vsel %vm2520, %v2455, %v2585
      %v2650 = vsel %vm2521, %v2456, %v2586
      %v2651 = vsel %vm2522, %v2457, %v2587
      %v2652 = vsel %vm2523, %v2458, %v2588
      %v2653 = vsel %vm2524, %v2459, %v2589
      %v2654 = vsel %vm2525, %v2460, %v2590
      %v2655 = vsel %vm2526, %v2461, %v2591
      %v2656 = vsel %vm2527, %v2462, %v2592
      %v2657 = vsel %vm2528, %v2463, %v2593
      %v2658 = vsel %vm2529, %v2464, %v2594
      %v2659 = vsel %vm2530, %v2465, %v2595
      %v2660 = vsel %vm2531, %v2466, %v2596
      %v2661 = vsel %vm2532, %v2467, %v2597
      %v2662 = vsel %vm2533, %v2468, %v2598
      %v2663 = vsel %vm2534, %v2469, %v2599
      %v2664 = vsel %vm2535, %v2470, %v2600
      %v2665 = vsel %vm2536, %v2471, %v2601
      %v2666 = vsel %vm2537, %v2472, %v2602
      %v2667 = vsel %vm2538, %v2473, %v2603
      %v2668 = vsel %vm2539, %v2474, %v2604
      %v2669 = vsel %vm2540, %v2475, %v2605
      %v2670 = vsel %vm2541, %v2476, %v2606
      %v2671 = vsel %vm2542, %v2477, %v2607
      %v2672 = vsel %vm2543, %v2478, %v2608
      %v2673 = vsel %vm2544, %v2479, %v2609
      %v2674 = vsel %vm2545, %v2480, %v2610
      %v2675 = vsel %vm2546, %v2481, %v2611
      %v2676 = vsel %vm2547, %v2482, %v2612
      %v2677 = vsel %vm2548, %v2483, %v2613
      %v2678 = vsel %vm2549, %v2484, %v2614
      %v2679 = vsel %vm2550, %v2485, %v2615
      %v2680 = vsel %vm2551, %v2486, %v2616
      %v2681 = vsel %vm2552, %v2487, %v2617
      %v2682 = vsel %vm2553, %v2488, %v2618
      %v2683 = vsel %vm2554, %v2489, %v2619
      %v2684 = vsel %vm2555, %v2490, %v2620
      %v2685 = vsel %vm2556, %v2491, %v2621
      %v2686 = vsel %vm2557, %v2492, %v2622
      %v2687 = vsel %vm2558, %v2493, %v2623
      %v2688 = vsel %vm2559, %v2494, %v2624
      %v2689 = vsel %vm2560, %v2495, %v2625
      %v2690 = vsel %vm2561, %v2496, %v2626
      %v2691 = vsel %vm2562, %v2497, %v2627
      %v2692 = vsel %vm2563, %v2498, %v2628
      %v2693 = vsel %vm2564, %v2499, %v2629
      %v2694 = vsel %vm2565, %v2500, %v2630
      %v2695 = vsel %vm2566, %v2501, %v2631
      %v2696 = vsel %vm2567, %v2502, %v2632
      %v2697 = vsel %vm2568, %v2503, %v2633
      %v2698 = vsel %vm2569, %v2504, %v2634
      %v2699 = vsel %vm2570, %v2505, %v2635
      %v2700 = vsel %vm2571, %v2506, %v2636
      %v2701 = vsel %vm2572, %v2507, %v2637
      %v2702 = vsel %vm2573, %v2508, %v2638
      %v2703 = vsel %vm2574, %v2509, %v2639
      %2704 = vst [vmem:[#allocation6] sm:$0xff] %v2640
      %2705 = vst [vmem:[#allocation6 + $0x8] sm:$0xff] %v2641
      %2706 = vst [vmem:[#allocation6 + $0x10] sm:$0xff] %v2642
      %2707 = vst [vmem:[#allocation6 + $0x18] sm:$0xff] %v2643
      %2708 = vst [vmem:[#allocation6 + $0x20] sm:$0xff] %v2644
      %2709 = vst [vmem:[#allocation6 + $0x28] sm:$0xff] %v2645
      %2710 = vst [vmem:[#allocation6 + $0x30] sm:$0xff] %v2646
      %2711 = vst [vmem:[#allocation6 + $0x38] sm:$0xff] %v2647
      %2712 = vst [vmem:[#allocation6 + $0x40] sm:$0xff] %v2648
      %2713 = vst [vmem:[#allocation6 + $0x48] sm:$0xff] %v2649
      %2714 = vst [vmem:[#allocation6 + $0x50] sm:$0xff] %v2650
      %2715 = vst [vmem:[#allocation6 + $0x58] sm:$0xff] %v2651
      %2716 = vst [vmem:[#allocation6 + $0x60] sm:$0xff] %v2652
      %2717 = vst [vmem:[#allocation6 + $0x68] sm:$0xff] %v2653
      %2718 = vst [vmem:[#allocation6 + $0x70] sm:$0xff] %v2654
      %2719 = vst [vmem:[#allocation6 + $0x78] sm:$0xff] %v2655
      %2720 = vst [vmem:[#allocation6 + $0x80] sm:$0xff] %v2656
      %2721 = vst [vmem:[#allocation6 + $0x88] sm:$0xff] %v2657
      %2722 = vst [vmem:[#allocation6 + $0x90] sm:$0xff] %v2658
      %2723 = vst [vmem:[#allocation6 + $0x98] sm:$0xff] %v2659
      %2724 = vst [vmem:[#allocation6 + $0xa0] sm:$0xff] %v2660
      %2725 = vst [vmem:[#allocation6 + $0xa8] sm:$0xff] %v2661
      %2726 = vst [vmem:[#allocation6 + $0xb0] sm:$0xff] %v2662
      %2727 = vst [vmem:[#allocation6 + $0xb8] sm:$0xff] %v2663
      %2728 = vst [vmem:[#allocation6 + $0xc0] sm:$0xff] %v2664
      %2729 = vst [vmem:[#allocation6 + $0xc8] sm:$0xff] %v2665
      %2730 = vst [vmem:[#allocation6 + $0xd0] sm:$0xff] %v2666
      %2731 = vst [vmem:[#allocation6 + $0xd8] sm:$0xff] %v2667
      %2732 = vst [vmem:[#allocation6 + $0xe0] sm:$0xff] %v2668
      %2733 = vst [vmem:[#allocation6 + $0xe8] sm:$0xff] %v2669
      %2734 = vst [vmem:[#allocation6 + $0xf0] sm:$0xff] %v2670
      %2735 = vst [vmem:[#allocation6 + $0xf8] sm:$0xff] %v2671
      %2736 = vst [vmem:[#allocation6 + $0x100] sm:$0xff] %v2672
      %2737 = vst [vmem:[#allocation6 + $0x108] sm:$0xff] %v2673
      %2738 = vst [vmem:[#allocation6 + $0x110] sm:$0xff] %v2674
      %2739 = vst [vmem:[#allocation6 + $0x118] sm:$0xff] %v2675
      %2740 = vst [vmem:[#allocation6 + $0x120] sm:$0xff] %v2676
      %2741 = vst [vmem:[#allocation6 + $0x128] sm:$0xff] %v2677
      %2742 = vst [vmem:[#allocation6 + $0x130] sm:$0xff] %v2678
      %2743 = vst [vmem:[#allocation6 + $0x138] sm:$0xff] %v2679
      %2744 = vst [vmem:[#allocation6 + $0x140] sm:$0xff] %v2680
      %2745 = vst [vmem:[#allocation6 + $0x148] sm:$0xff] %v2681
      %2746 = vst [vmem:[#allocation6 + $0x150] sm:$0xff] %v2682
      %2747 = vst [vmem:[#allocation6 + $0x158] sm:$0xff] %v2683
      %2748 = vst [vmem:[#allocation6 + $0x160] sm:$0xff] %v2684
      %2749 = vst [vmem:[#allocation6 + $0x168] sm:$0xff] %v2685
      %2750 = vst [vmem:[#allocation6 + $0x170] sm:$0xff] %v2686
      %2751 = vst [vmem:[#allocation6 + $0x178] sm:$0xff] %v2687
      %2752 = vst [vmem:[#allocation6 + $0x180] sm:$0xff] %v2688
      %2753 = vst [vmem:[#allocation6 + $0x188] sm:$0xff] %v2689
      %2754 = vst [vmem:[#allocation6 + $0x190] sm:$0xff] %v2690
      %2755 = vst [vmem:[#allocation6 + $0x198] sm:$0xff] %v2691
      %2756 = vst [vmem:[#allocation6 + $0x1a0] sm:$0xff] %v2692
      %2757 = vst [vmem:[#allocation6 + $0x1a8] sm:$0xff] %v2693
      %2758 = vst [vmem:[#allocation6 + $0x1b0] sm:$0xff] %v2694
      %2759 = vst [vmem:[#allocation6 + $0x1b8] sm:$0xff] %v2695
      %2760 = vst [vmem:[#allocation6 + $0x1c0] sm:$0xff] %v2696
      %2761 = vst [vmem:[#allocation6 + $0x1c8] sm:$0xff] %v2697
      %2762 = vst [vmem:[#allocation6 + $0x1d0] sm:$0xff] %v2698
      %2763 = vst [vmem:[#allocation6 + $0x1d8] sm:$0xff] %v2699
      %2764 = vst [vmem:[#allocation6 + $0x1e0] sm:$0xff] %v2700
      %2765 = vst [vmem:[#allocation6 + $0x1e8] sm:$0xff] %v2701
      %2766 = vst [vmem:[#allocation6 + $0x1f0] sm:$0xff] %v2702
      %2767 = vst [vmem:[#allocation6 + $0x1f8] sm:$0xff] %v2703
    $region29: #{tpu_custom_call.1} parent=1 // pred_fallthru
      _
    // Predicated region
    $region30: #{tpu_custom_call.1} parent=1 // pred_check
      _
    $region31: #{tpu_custom_call.1} parent=1 // pred_check_branch
      %2769 = sbr.rel (0) target = $region33
    $region32: #{tpu_custom_call.1} parent=1 // pred_region
      %2771 = vsyncadd [#allocation5], 0
      %s2772 = sshll.u32 [#allocation6], 4
      %s2773 = int_to_ptr.vmem [resolvable:$true] %s2772
      %s2774 = sshll.u32 %s4, 4
      %s2775 = int_to_ptr.hbm [resolvable:$true] %s2774
      %2780 = dma.vmem_to_hbm [thread:$0]  %s2773, 8192, %s2775, [#allocation5], 128, 128, 8
    $region33: #{tpu_custom_call.1} parent=1 // pred_fallthru
      _
    // Predicated region
    $region34: #{tpu_custom_call.1} parent=1 // pred_check
      _
    $region35: #{tpu_custom_call.1} parent=1 // pred_check_branch
      %2782 = sbr.rel (0) target = $region37
    $region36: #{tpu_custom_call.1} parent=1 // pred_region
      %2784 = dma.done [#allocation5], 8192
    $region37: #{tpu_custom_call.1} parent=1 // pred_fallthru
      _
    %2785 = vsyncpa [#allocation4], 1
    %2786 = vsyncpa [#allocation5], 1

</llo_original>
